<compile_context>
chip_gen: v5e
topology: v5e:2x2
jax: 0.10.0
libtpu: 0.0.40
codegen_flags: <defaults>
</compile_context>

<pallas_src>
import math

import jax
import jax.numpy as jnp
import numpy as np
from jax.experimental import pallas as pl
from jax.experimental.pallas import tpu as pltpu  # noqa: F401

# ---------------- problem sizes (small, consistent with the module) ----------
B = 2          # batch
L = 8          # sequence / node count (power of two -> cheap % via bitwise and)
H = 32         # hidden size
N_NODE = 40    # embedding table rows
NPAD = 64      # padded embedding rows (one-time pad at param-prep time)
STEP = 1       # StarGNN propagation steps (opt.step)

assert L & (L - 1) == 0, "in-kernel adjacency expansion assumes L is a power of two"

_LN_EPS = 1e-5
_INV_SQRT_H = 1.0 / math.sqrt(H)
_NEG_BIG = -1e30

_NW = 15       # weight slab entries
_NB = 19       # bias slab entries


# ------------------------------ Pallas kernel --------------------------------
def star_gnn_kernel(inp_ref, a_ref, mask_ref, emb_ref, w_ref, b_ref,
                    hid_out_ref, s_out_ref):
    f32 = jnp.float32
    BL = B * L

    def mm(a, b):
        return jnp.dot(a, b, preferred_element_type=f32)

    # ---- hoisted slab views (one DMA per slab; static leading-axis reads) ----
    (w_ei_r, w_ei_i, w_ei_n,
     w_eo_r, w_eo_i, w_eo_n,
     w_hh_r, w_hh_i, w_hh_n,
     w_q1, w_k1, w_q2, w_k2,
     w_ga, w_gb) = [w_ref[i] for i in range(_NW)]                 # each (H, H)

    (ln_w, ln_b,
     b_ei_r, b_ei_i, b_ei_n,
     b_eo_r, b_eo_i, b_eo_n,
     b_hh_r, b_hh_i, b_hh_n,
     b_gi_r, b_gi_i, b_gi_n,
     b_q1, b_k1, b_q2, b_k2, b_g) = [b_ref[i] for i in range(_NB)]  # each (1, H)

    # ---- per-batch segment one-hots (iota-built; no integer division) ----
    row = jax.lax.broadcasted_iota(jnp.int32, (BL, B), 0)         # node index
    col = jax.lax.broadcasted_iota(jnp.int32, (BL, B), 1)         # batch index
    seg_valid = (row >= col * L) & (row < (col + 1) * L)          # (BL, B)
    seg_f = seg_valid.astype(f32)                                 # node -> own batch one-hot
    r_t = jax.lax.broadcasted_iota(jnp.int32, (B, BL), 0)
    c_t = jax.lax.broadcasted_iota(jnp.int32, (B, BL), 1)
    segT_f = ((c_t >= r_t * L) & (c_t < (r_t + 1) * L)).astype(f32)  # (B, BL) batch-sum matrix
    same_f = mm(seg_f, segT_f)                                    # (BL, BL) same-batch mask

    def seg_softmax(scores):      # per-batch softmax over the node (sublane) axis
        masked = jnp.where(seg_valid, scores, _NEG_BIG)
        m = jnp.max(masked, axis=0, keepdims=True)
        e = jnp.exp(masked - m)
        cols = e / jnp.sum(e, axis=0, keepdims=True)              # (BL, B)
        return jnp.sum(cols, axis=-1, keepdims=True)              # (BL, 1) own-batch weight

    # ---- in-kernel embedding gather: one-hot @ table on the idle MXU ----
    inp = inp_ref[...]                                            # (BL, 1) int32
    lanes = jax.lax.broadcasted_iota(jnp.int32, (BL, NPAD), 1)
    onehot = (lanes == inp).astype(f32)                           # (BL, NPAD)
    x = mm(onehot, emb_ref[...])                                  # (BL, H)

    # ---- LayerNorm3 ----
    mean = jnp.mean(x, axis=-1, keepdims=True)
    var = jnp.mean((x - mean) ** 2, axis=-1, keepdims=True)
    h = (x - mean) * jax.lax.rsqrt(var + _LN_EPS) * ln_w + ln_b
    hidden0 = h

    # ---- in-kernel block-diagonal adjacency from the flat (BL, 2L) A ----
    a_flat = a_ref[...]                                           # (BL, 2L)
    rr = jax.lax.broadcasted_iota(jnp.int32, (2 * L, BL), 0)
    cc = jax.lax.broadcasted_iota(jnp.int32, (2 * L, BL), 1)
    c_mod = jnp.bitwise_and(cc, L - 1)                            # cc % L (L power of two)
    rep_in = (rr == c_mod).astype(f32)                            # picks A[:, :L]
    rep_out = (rr == (c_mod + L)).astype(f32)                     # picks A[:, L:]
    a_in = mm(a_flat, rep_in) * same_f                            # (BL, BL) block-diag
    a_out = mm(a_flat, rep_out) * same_f

    # ---- star node init: s[b] = sum_i h[b,i] / (sum(mask[b]) + 1e-6) ----
    msum = jnp.sum(mask_ref[...], axis=-1, keepdims=True)         # (B, 1)
    s = mm(segT_f, h) / (msum + 1e-6)                             # (B, H)

    # loop-invariant half of the highway gate
    g_pre = mm(hidden0, w_ga) + b_g                               # (BL, H)

    for _ in range(STEP):
        # star keys / broadcast depend only on s -> overlap with GRU path
        k1 = mm(s, w_k1) + b_k1                                   # (B, H)
        k2 = mm(s, w_k2) + b_k2
        s_bcast = mm(seg_f, s)                                    # (BL, H)

        # per-gate projections of h (w_ih pre-folded into edge weights); each a clean (BL,H)
        x_in_r = mm(h, w_ei_r) + b_ei_r
        x_in_i = mm(h, w_ei_i) + b_ei_i
        x_in_n = mm(h, w_ei_n) + b_ei_n
        x_out_r = mm(h, w_eo_r) + b_eo_r
        x_out_i = mm(h, w_eo_i) + b_eo_i
        x_out_n = mm(h, w_eo_n) + b_eo_n
        gh_r = mm(h, w_hh_r) + b_hh_r
        gh_i = mm(h, w_hh_i) + b_hh_i
        gh_n = mm(h, w_hh_n) + b_hh_n

        # graph aggregation over the block-diagonal adjacency (depth-2 matmul chain)
        i_r = mm(a_in, x_in_r) + mm(a_out, x_out_r) + b_gi_r
        i_i = mm(a_in, x_in_i) + mm(a_out, x_out_i) + b_gi_i
        i_n = mm(a_in, x_in_n) + mm(a_out, x_out_n) + b_gi_n

        # GRU-style gates (GNNCell)
        resetgate = jax.nn.sigmoid(i_r + gh_r)
        inputgate = jax.nn.sigmoid(i_i + gh_i)
        newgate = jnp.tanh(i_n + resetgate * gh_n)
        hidden1 = newgate + inputgate * (h - newgate)             # (BL, H)

        # alpha: node -> own star node, per-batch softmax over nodes
        q1 = mm(hidden1, w_q1) + b_q1
        sc1 = jax.lax.dot_general(q1, k1, (((1,), (1,)), ((), ())),
                                  preferred_element_type=f32) * _INV_SQRT_H   # (BL, B)
        alpha = seg_softmax(sc1)                                  # (BL, 1)
        h = (1.0 - alpha) * hidden1 + alpha * s_bcast

        # beta: star-node update (uses old s via k2)
        q2 = mm(h, w_q2) + b_q2
        sc2 = jax.lax.dot_general(q2, k2, (((1,), (1,)), ((), ())),
                                  preferred_element_type=f32) * _INV_SQRT_H
        beta = seg_softmax(sc2)                                   # (BL, 1)
        s = mm(segT_f, beta * h)                                  # (B, H)

    # ---- highway gate (Wg split; no lane-axis concat) ----
    g = jax.nn.sigmoid(g_pre + mm(h, w_gb))
    hid_out_ref[...] = g * hidden0 + (1.0 - g) * h
    s_out_ref[...] = s


# ------------------------ one-time parameter preparation ----------------------
def prepare_params(params):
    """Runs ONCE (outside the jitted per-call path). Folds w_ih into the edge weights,
    folds all biases, splits Wg, pads the embedding table, packs everything into slabs."""
    wih_in = params["wih_t"][:H]        # (H, 3H)
    wih_out = params["wih_t"][H:]       # (H, 3H)

    def gate(m, g):
        return m[:, g * H:(g + 1) * H]

    ws = []
    for g in range(3):
        ws.append(params["wei"] @ gate(wih_in, g))     # wei' per gate
    for g in range(3):
        ws.append(params["weo"] @ gate(wih_out, g))    # weo' per gate
    for g in range(3):
        ws.append(gate(params["whh_t"], g))            # whh per gate
    ws += [params["wq1"], params["wk1"], params["wq2"], params["wk2"]]
    ws += [params["wg_t"][:H], params["wg_t"][H:]]
    w_slab = jnp.stack(ws, axis=0)                     # (15, H, H)

    bs = [params["ln_w"], params["ln_b"]]
    for g in range(3):
        bs.append(params["bei"] @ gate(wih_in, g))
    for g in range(3):
        bs.append(params["beo"] @ gate(wih_out, g))
    for g in range(3):
        bs.append(gate(params["b_hh"], g))
    for g in range(3):
        bs.append(params["b_iah"] @ gate(wih_in, g)
                  + params["b_oah"] @ gate(wih_out, g)
                  + gate(params["b_ih"], g))
    bs += [params["bq1"], params["bk1"], params["bq2"], params["bk2"], params["bg"]]
    b_slab = jnp.stack(bs, axis=0)                     # (19, 1, H)

    emb_pad = jnp.zeros((NPAD, H), jnp.float32).at[:N_NODE].set(params["emb"])
    return {"w_slab": w_slab, "b_slab": b_slab, "emb": emb_pad}


# ------------------------------ per-call wrapper -------------------------------
@jax.jit
def star_session_graph_forward(prep, inputs, A, mask):
    """inputs: (B, L) int32 ; A: (B, L, 2L) f32 ; mask: (B, L) f32."""
    inp_col = inputs.reshape(B * L, 1)                 # trivial contiguous reshape
    a_flat = A.reshape(B * L, 2 * L)
    hid_flat, s = pl.pallas_call(
        star_gnn_kernel,
        out_shape=(jax.ShapeDtypeStruct((B * L, H), jnp.float32),
                   jax.ShapeDtypeStruct((B, H), jnp.float32)),
    )(inp_col, a_flat, mask, prep["emb"], prep["w_slab"], prep["b_slab"])
    return hid_flat.reshape(B, L, H), s[:, None, :]


# ------------------------------ pure-JAX reference ----------------------------
def ref_forward(params, inputs, A, mask):
    x = params["emb"][inputs]
    mean = x.mean(-1, keepdims=True)
    var = ((x - mean) ** 2).mean(-1, keepdims=True)
    h = (x - mean) / jnp.sqrt(var + _LN_EPS) * params["ln_w"] + params["ln_b"]
    hidden0 = h
    s = h.sum(1) / (mask.sum(1) + 1e-6)[:, None]
    s = s[:, None, :]
    for _ in range(STEP):
        edge_in = h @ params["wei"] + params["bei"]
        edge_out = h @ params["weo"] + params["beo"]
        input_in = A[:, :, :L] @ edge_in + params["b_iah"]
        input_out = A[:, :, L:] @ edge_out + params["b_oah"]
        inp = jnp.concatenate([input_in, input_out], -1)
        gi = inp @ params["wih_t"] + params["b_ih"]
        gh = h @ params["whh_t"] + params["b_hh"]
        i_r, i_i, i_n = gi[..., :H], gi[..., H:2 * H], gi[..., 2 * H:]
        h_r, h_i, h_n = gh[..., :H], gh[..., H:2 * H], gh[..., 2 * H:]
        resetgate = jax.nn.sigmoid(i_r + h_r)
        inputgate = jax.nn.sigmoid(i_i + h_i)
        newgate = jnp.tanh(i_n + resetgate * h_n)
        hidden1 = newgate + inputgate * (h - newgate)
        q1 = hidden1 @ params["wq1"] + params["bq1"]
        k1 = s @ params["wk1"] + params["bk1"]
        alpha = jnp.einsum("blh,bkh->blk", q1, k1) * _INV_SQRT_H
        alpha = jax.nn.softmax(alpha, axis=1)
        h = (1 - alpha) * hidden1 + alpha * s
        q2 = h @ params["wq2"] + params["bq2"]
        k2 = s @ params["wk2"] + params["bk2"]
        beta = jax.nn.softmax(jnp.einsum("blh,bkh->blk", q2, k2) * _INV_SQRT_H, axis=1)
        s = jnp.sum(beta * h, axis=1, keepdims=True)
    g = jax.nn.sigmoid(jnp.concatenate([hidden0, h], -1) @ params["wg_t"] + params["bg"])
    hidden = g * hidden0 + (1 - g) * h
    return hidden, s


# ------------------------------ param init ------------------------------------
def init_params(key):
    # Mirrors reset_parameters(): every weight ~ Normal(0, 0.1).  Linear weights
    # are stored pre-transposed ([in, out]) so the math does x @ W directly.
    shapes = {
        "emb": (N_NODE, H),
        "ln_w": (1, H), "ln_b": (1, H),
        "wei": (H, H), "bei": (1, H),
        "weo": (H, H), "beo": (1, H),
        "b_iah": (1, H), "b_oah": (1, H),
        "wih_t": (2 * H, 3 * H), "b_ih": (1, 3 * H),
        "whh_t": (H, 3 * H), "b_hh": (1, 3 * H),
        "wq1": (H, H), "bq1": (1, H),
        "wk1": (H, H), "bk1": (1, H),
        "wq2": (H, H), "bq2": (1, H),
        "wk2": (H, H), "bk2": (1, H),
        "wg_t": (2 * H, H), "bg": (1, H),
    }
    params = {}
    keys = jax.random.split(key, len(shapes))
    for k, (name, shp) in zip(keys, sorted(shapes.items())):
        params[name] = 0.1 * jax.random.normal(k, shp, dtype=jnp.float32)
    return params


# ------------------------------ main -------------------------------------------
if __name__ == "__main__":
    root = jax.random.PRNGKey(0)
    k_param, k_in, k_a = jax.random.split(root, 3)

    params = init_params(k_param)
    prep = prepare_params(params)          # one-time weight fusion / packing

    inputs = jax.random.randint(k_in, (B, L), minval=1, maxval=N_NODE, dtype=jnp.int32)
    A = jax.random.uniform(k_a, (B, L, 2 * L), dtype=jnp.float32)
    lengths = np.array([5, 8])
    mask_np = np.zeros((B, L), dtype=np.float32)
    for b in range(B):
        mask_np[b, : lengths[b]] = 1.0
    mask = jnp.asarray(mask_np)

    hidden, s = star_session_graph_forward(prep, inputs, A, mask)
    hidden = jax.block_until_ready(hidden)
    s = jax.block_until_ready(s)

    hidden_ref, s_ref = ref_forward(params, inputs, A, mask)
    np.testing.assert_allclose(np.asarray(hidden), np.asarray(hidden_ref), rtol=1e-4, atol=1e-4)
    np.testing.assert_allclose(np.asarray(s), np.asarray(s_ref), rtol=1e-4, atol=1e-4)

    print("KERNEL_OK")
</pallas_src>

<mosaic_0001>
module attributes {stable_mosaic.version = 11 : i64} {
  func.func @star_gnn_kernel(%arg0: memref<16x1xi32, #tpu.memory_space<vmem>>, %arg1: memref<16x16xf32, #tpu.memory_space<vmem>>, %arg2: memref<2x8xf32, #tpu.memory_space<vmem>>, %arg3: memref<64x32xf32, #tpu.memory_space<vmem>>, %arg4: memref<15x32x32xf32, #tpu.memory_space<vmem>>, %arg5: memref<19x1x32xf32, #tpu.memory_space<vmem>>, %arg6: memref<16x32xf32, #tpu.memory_space<vmem>>, %arg7: memref<2x32xf32, #tpu.memory_space<vmem>>) attributes {dimension_semantics = [], scalar_prefetch = 0 : i64, scratch_operands = 0 : i64, tpu.core_type = #tpu.core_type<tc>} {
    %c0 = arith.constant 0 : index
    %c0_0 = arith.constant 0 : index
    %c0_1 = arith.constant 0 : index
    %0 = vector.load %arg4[%c0, %c0_0, %c0_1] : memref<15x32x32xf32, #tpu.memory_space<vmem>>, vector<1x32x32xf32>
    %1 = vector.shape_cast %0 : vector<1x32x32xf32> to vector<32x32xf32>
    %c1 = arith.constant 1 : index
    %c0_2 = arith.constant 0 : index
    %c0_3 = arith.constant 0 : index
    %2 = vector.load %arg4[%c1, %c0_2, %c0_3] : memref<15x32x32xf32, #tpu.memory_space<vmem>>, vector<1x32x32xf32>
    %3 = vector.shape_cast %2 : vector<1x32x32xf32> to vector<32x32xf32>
    %c2 = arith.constant 2 : index
    %c0_4 = arith.constant 0 : index
    %c0_5 = arith.constant 0 : index
    %4 = vector.load %arg4[%c2, %c0_4, %c0_5] : memref<15x32x32xf32, #tpu.memory_space<vmem>>, vector<1x32x32xf32>
    %5 = vector.shape_cast %4 : vector<1x32x32xf32> to vector<32x32xf32>
    %c3 = arith.constant 3 : index
    %c0_6 = arith.constant 0 : index
    %c0_7 = arith.constant 0 : index
    %6 = vector.load %arg4[%c3, %c0_6, %c0_7] : memref<15x32x32xf32, #tpu.memory_space<vmem>>, vector<1x32x32xf32>
    %7 = vector.shape_cast %6 : vector<1x32x32xf32> to vector<32x32xf32>
    %c4 = arith.constant 4 : index
    %c0_8 = arith.constant 0 : index
    %c0_9 = arith.constant 0 : index
    %8 = vector.load %arg4[%c4, %c0_8, %c0_9] : memref<15x32x32xf32, #tpu.memory_space<vmem>>, vector<1x32x32xf32>
    %9 = vector.shape_cast %8 : vector<1x32x32xf32> to vector<32x32xf32>
    %c5 = arith.constant 5 : index
    %c0_10 = arith.constant 0 : index
    %c0_11 = arith.constant 0 : index
    %10 = vector.load %arg4[%c5, %c0_10, %c0_11] : memref<15x32x32xf32, #tpu.memory_space<vmem>>, vector<1x32x32xf32>
    %11 = vector.shape_cast %10 : vector<1x32x32xf32> to vector<32x32xf32>
    %c6 = arith.constant 6 : index
    %c0_12 = arith.constant 0 : index
    %c0_13 = arith.constant 0 : index
    %12 = vector.load %arg4[%c6, %c0_12, %c0_13] : memref<15x32x32xf32, #tpu.memory_space<vmem>>, vector<1x32x32xf32>
    %13 = vector.shape_cast %12 : vector<1x32x32xf32> to vector<32x32xf32>
    %c7 = arith.constant 7 : index
    %c0_14 = arith.constant 0 : index
    %c0_15 = arith.constant 0 : index
    %14 = vector.load %arg4[%c7, %c0_14, %c0_15] : memref<15x32x32xf32, #tpu.memory_space<vmem>>, vector<1x32x32xf32>
    %15 = vector.shape_cast %14 : vector<1x32x32xf32> to vector<32x32xf32>
    %c8 = arith.constant 8 : index
    %c0_16 = arith.constant 0 : index
    %c0_17 = arith.constant 0 : index
    %16 = vector.load %arg4[%c8, %c0_16, %c0_17] : memref<15x32x32xf32, #tpu.memory_space<vmem>>, vector<1x32x32xf32>
    %17 = vector.shape_cast %16 : vector<1x32x32xf32> to vector<32x32xf32>
    %c9 = arith.constant 9 : index
    %c0_18 = arith.constant 0 : index
    %c0_19 = arith.constant 0 : index
    %18 = vector.load %arg4[%c9, %c0_18, %c0_19] : memref<15x32x32xf32, #tpu.memory_space<vmem>>, vector<1x32x32xf32>
    %19 = vector.shape_cast %18 : vector<1x32x32xf32> to vector<32x32xf32>
    %c10 = arith.constant 10 : index
    %c0_20 = arith.constant 0 : index
    %c0_21 = arith.constant 0 : index
    %20 = vector.load %arg4[%c10, %c0_20, %c0_21] : memref<15x32x32xf32, #tpu.memory_space<vmem>>, vector<1x32x32xf32>
    %21 = vector.shape_cast %20 : vector<1x32x32xf32> to vector<32x32xf32>
    %c11 = arith.constant 11 : index
    %c0_22 = arith.constant 0 : index
    %c0_23 = arith.constant 0 : index
    %22 = vector.load %arg4[%c11, %c0_22, %c0_23] : memref<15x32x32xf32, #tpu.memory_space<vmem>>, vector<1x32x32xf32>
    %23 = vector.shape_cast %22 : vector<1x32x32xf32> to vector<32x32xf32>
    %c12 = arith.constant 12 : index
    %c0_24 = arith.constant 0 : index
    %c0_25 = arith.constant 0 : index
    %24 = vector.load %arg4[%c12, %c0_24, %c0_25] : memref<15x32x32xf32, #tpu.memory_space<vmem>>, vector<1x32x32xf32>
    %25 = vector.shape_cast %24 : vector<1x32x32xf32> to vector<32x32xf32>
    %c13 = arith.constant 13 : index
    %c0_26 = arith.constant 0 : index
    %c0_27 = arith.constant 0 : index
    %26 = vector.load %arg4[%c13, %c0_26, %c0_27] : memref<15x32x32xf32, #tpu.memory_space<vmem>>, vector<1x32x32xf32>
    %27 = vector.shape_cast %26 : vector<1x32x32xf32> to vector<32x32xf32>
    %c14 = arith.constant 14 : index
    %c0_28 = arith.constant 0 : index
    %c0_29 = arith.constant 0 : index
    %28 = vector.load %arg4[%c14, %c0_28, %c0_29] : memref<15x32x32xf32, #tpu.memory_space<vmem>>, vector<1x32x32xf32>
    %29 = vector.shape_cast %28 : vector<1x32x32xf32> to vector<32x32xf32>
    %c0_30 = arith.constant 0 : index
    %c0_31 = arith.constant 0 : index
    %c0_32 = arith.constant 0 : index
    %30 = vector.load %arg5[%c0_30, %c0_31, %c0_32] : memref<19x1x32xf32, #tpu.memory_space<vmem>>, vector<1x1x32xf32>
    %31 = vector.shape_cast %30 : vector<1x1x32xf32> to vector<1x32xf32>
    %c1_33 = arith.constant 1 : index
    %c0_34 = arith.constant 0 : index
    %c0_35 = arith.constant 0 : index
    %32 = vector.load %arg5[%c1_33, %c0_34, %c0_35] : memref<19x1x32xf32, #tpu.memory_space<vmem>>, vector<1x1x32xf32>
    %33 = vector.shape_cast %32 : vector<1x1x32xf32> to vector<1x32xf32>
    %c2_36 = arith.constant 2 : index
    %c0_37 = arith.constant 0 : index
    %c0_38 = arith.constant 0 : index
    %34 = vector.load %arg5[%c2_36, %c0_37, %c0_38] : memref<19x1x32xf32, #tpu.memory_space<vmem>>, vector<1x1x32xf32>
    %35 = vector.shape_cast %34 : vector<1x1x32xf32> to vector<1x32xf32>
    %c3_39 = arith.constant 3 : index
    %c0_40 = arith.constant 0 : index
    %c0_41 = arith.constant 0 : index
    %36 = vector.load %arg5[%c3_39, %c0_40, %c0_41] : memref<19x1x32xf32, #tpu.memory_space<vmem>>, vector<1x1x32xf32>
    %37 = vector.shape_cast %36 : vector<1x1x32xf32> to vector<1x32xf32>
    %c4_42 = arith.constant 4 : index
    %c0_43 = arith.constant 0 : index
    %c0_44 = arith.constant 0 : index
    %38 = vector.load %arg5[%c4_42, %c0_43, %c0_44] : memref<19x1x32xf32, #tpu.memory_space<vmem>>, vector<1x1x32xf32>
    %39 = vector.shape_cast %38 : vector<1x1x32xf32> to vector<1x32xf32>
    %c5_45 = arith.constant 5 : index
    %c0_46 = arith.constant 0 : index
    %c0_47 = arith.constant 0 : index
    %40 = vector.load %arg5[%c5_45, %c0_46, %c0_47] : memref<19x1x32xf32, #tpu.memory_space<vmem>>, vector<1x1x32xf32>
    %41 = vector.shape_cast %40 : vector<1x1x32xf32> to vector<1x32xf32>
    %c6_48 = arith.constant 6 : index
    %c0_49 = arith.constant 0 : index
    %c0_50 = arith.constant 0 : index
    %42 = vector.load %arg5[%c6_48, %c0_49, %c0_50] : memref<19x1x32xf32, #tpu.memory_space<vmem>>, vector<1x1x32xf32>
    %43 = vector.shape_cast %42 : vector<1x1x32xf32> to vector<1x32xf32>
    %c7_51 = arith.constant 7 : index
    %c0_52 = arith.constant 0 : index
    %c0_53 = arith.constant 0 : index
    %44 = vector.load %arg5[%c7_51, %c0_52, %c0_53] : memref<19x1x32xf32, #tpu.memory_space<vmem>>, vector<1x1x32xf32>
    %45 = vector.shape_cast %44 : vector<1x1x32xf32> to vector<1x32xf32>
    %c8_54 = arith.constant 8 : index
    %c0_55 = arith.constant 0 : index
    %c0_56 = arith.constant 0 : index
    %46 = vector.load %arg5[%c8_54, %c0_55, %c0_56] : memref<19x1x32xf32, #tpu.memory_space<vmem>>, vector<1x1x32xf32>
    %47 = vector.shape_cast %46 : vector<1x1x32xf32> to vector<1x32xf32>
    %c9_57 = arith.constant 9 : index
    %c0_58 = arith.constant 0 : index
    %c0_59 = arith.constant 0 : index
    %48 = vector.load %arg5[%c9_57, %c0_58, %c0_59] : memref<19x1x32xf32, #tpu.memory_space<vmem>>, vector<1x1x32xf32>
    %49 = vector.shape_cast %48 : vector<1x1x32xf32> to vector<1x32xf32>
    %c10_60 = arith.constant 10 : index
    %c0_61 = arith.constant 0 : index
    %c0_62 = arith.constant 0 : index
    %50 = vector.load %arg5[%c10_60, %c0_61, %c0_62] : memref<19x1x32xf32, #tpu.memory_space<vmem>>, vector<1x1x32xf32>
    %51 = vector.shape_cast %50 : vector<1x1x32xf32> to vector<1x32xf32>
    %c11_63 = arith.constant 11 : index
    %c0_64 = arith.constant 0 : index
    %c0_65 = arith.constant 0 : index
    %52 = vector.load %arg5[%c11_63, %c0_64, %c0_65] : memref<19x1x32xf32, #tpu.memory_space<vmem>>, vector<1x1x32xf32>
    %53 = vector.shape_cast %52 : vector<1x1x32xf32> to vector<1x32xf32>
    %c12_66 = arith.constant 12 : index
    %c0_67 = arith.constant 0 : index
    %c0_68 = arith.constant 0 : index
    %54 = vector.load %arg5[%c12_66, %c0_67, %c0_68] : memref<19x1x32xf32, #tpu.memory_space<vmem>>, vector<1x1x32xf32>
    %55 = vector.shape_cast %54 : vector<1x1x32xf32> to vector<1x32xf32>
    %c13_69 = arith.constant 13 : index
    %c0_70 = arith.constant 0 : index
    %c0_71 = arith.constant 0 : index
    %56 = vector.load %arg5[%c13_69, %c0_70, %c0_71] : memref<19x1x32xf32, #tpu.memory_space<vmem>>, vector<1x1x32xf32>
    %57 = vector.shape_cast %56 : vector<1x1x32xf32> to vector<1x32xf32>
    %c14_72 = arith.constant 14 : index
    %c0_73 = arith.constant 0 : index
    %c0_74 = arith.constant 0 : index
    %58 = vector.load %arg5[%c14_72, %c0_73, %c0_74] : memref<19x1x32xf32, #tpu.memory_space<vmem>>, vector<1x1x32xf32>
    %59 = vector.shape_cast %58 : vector<1x1x32xf32> to vector<1x32xf32>
    %c15 = arith.constant 15 : index
    %c0_75 = arith.constant 0 : index
    %c0_76 = arith.constant 0 : index
    %60 = vector.load %arg5[%c15, %c0_75, %c0_76] : memref<19x1x32xf32, #tpu.memory_space<vmem>>, vector<1x1x32xf32>
    %61 = vector.shape_cast %60 : vector<1x1x32xf32> to vector<1x32xf32>
    %c16 = arith.constant 16 : index
    %c0_77 = arith.constant 0 : index
    %c0_78 = arith.constant 0 : index
    %62 = vector.load %arg5[%c16, %c0_77, %c0_78] : memref<19x1x32xf32, #tpu.memory_space<vmem>>, vector<1x1x32xf32>
    %63 = vector.shape_cast %62 : vector<1x1x32xf32> to vector<1x32xf32>
    %c17 = arith.constant 17 : index
    %c0_79 = arith.constant 0 : index
    %c0_80 = arith.constant 0 : index
    %64 = vector.load %arg5[%c17, %c0_79, %c0_80] : memref<19x1x32xf32, #tpu.memory_space<vmem>>, vector<1x1x32xf32>
    %65 = vector.shape_cast %64 : vector<1x1x32xf32> to vector<1x32xf32>
    %c18 = arith.constant 18 : index
    %c0_81 = arith.constant 0 : index
    %c0_82 = arith.constant 0 : index
    %66 = vector.load %arg5[%c18, %c0_81, %c0_82] : memref<19x1x32xf32, #tpu.memory_space<vmem>>, vector<1x1x32xf32>
    %67 = vector.shape_cast %66 : vector<1x1x32xf32> to vector<1x32xf32>
    %68 = tpu.iota {dimensions = array<i32: 0>} : vector<16x2xi32>
    %69 = tpu.iota {dimensions = array<i32: 1>} : vector<16x2xi32>
    %c8_i32 = arith.constant 8 : i32
    %70 = vector.broadcast %c8_i32 : i32 to vector<16x2xi32>
    %71 = arith.muli %69, %70 : vector<16x2xi32>
    %72 = arith.cmpi sge, %68, %71 : vector<16x2xi32>
    %c1_i32 = arith.constant 1 : i32
    %73 = vector.broadcast %c1_i32 : i32 to vector<16x2xi32>
    %74 = arith.addi %69, %73 : vector<16x2xi32>
    %c8_i32_83 = arith.constant 8 : i32
    %75 = vector.broadcast %c8_i32_83 : i32 to vector<16x2xi32>
    %76 = arith.muli %74, %75 : vector<16x2xi32>
    %77 = arith.cmpi slt, %68, %76 : vector<16x2xi32>
    %78 = arith.andi %72, %77 : vector<16x2xi1>
    %79 = arith.extui %78 : vector<16x2xi1> to vector<16x2xi32>
    %80 = arith.sitofp %79 : vector<16x2xi32> to vector<16x2xf32>
    %81 = tpu.iota {dimensions = array<i32: 0>} : vector<2x16xi32>
    %82 = tpu.iota {dimensions = array<i32: 1>} : vector<2x16xi32>
    %c8_i32_84 = arith.constant 8 : i32
    %83 = vector.broadcast %c8_i32_84 : i32 to vector<2x16xi32>
    %84 = arith.muli %81, %83 : vector<2x16xi32>
    %85 = arith.cmpi sge, %82, %84 : vector<2x16xi32>
    %c1_i32_85 = arith.constant 1 : i32
    %86 = vector.broadcast %c1_i32_85 : i32 to vector<2x16xi32>
    %87 = arith.addi %81, %86 : vector<2x16xi32>
    %c8_i32_86 = arith.constant 8 : i32
    %88 = vector.broadcast %c8_i32_86 : i32 to vector<2x16xi32>
    %89 = arith.muli %87, %88 : vector<2x16xi32>
    %90 = arith.cmpi slt, %82, %89 : vector<2x16xi32>
    %91 = arith.andi %85, %90 : vector<2x16xi1>
    %92 = arith.extui %91 : vector<2x16xi1> to vector<2x16xi32>
    %93 = arith.sitofp %92 : vector<2x16xi32> to vector<2x16xf32>
    %cst = arith.constant dense<0.000000e+00> : vector<16x16xf32>
    %94 = tpu.matmul %80, %93, %cst {dimension_numbers = #tpu.dot_dimension_numbers<[1], [0], [0], [1], [0, 0, 1, 1], [], []>} : vector<16x2xf32>, vector<2x16xf32>, vector<16x16xf32> -> vector<16x16xf32>
    %c0_87 = arith.constant 0 : index
    %c0_88 = arith.constant 0 : index
    %95 = vector.load %arg0[%c0_87, %c0_88] : memref<16x1xi32, #tpu.memory_space<vmem>>, vector<16x1xi32>
    %96 = tpu.iota {dimensions = array<i32: 1>} : vector<16x64xi32>
    %97 = vector.broadcast %95 : vector<16x1xi32> to vector<16x64xi32>
    %98 = arith.cmpi eq, %96, %97 : vector<16x64xi32>
    %99 = arith.extui %98 : vector<16x64xi1> to vector<16x64xi32>
    %100 = arith.sitofp %99 : vector<16x64xi32> to vector<16x64xf32>
    %c0_89 = arith.constant 0 : index
    %c0_90 = arith.constant 0 : index
    %101 = vector.load %arg3[%c0_89, %c0_90] : memref<64x32xf32, #tpu.memory_space<vmem>>, vector<64x32xf32>
    %cst_91 = arith.constant dense<0.000000e+00> : vector<16x32xf32>
    %102 = tpu.matmul %100, %101, %cst_91 {dimension_numbers = #tpu.dot_dimension_numbers<[1], [0], [0], [1], [0, 0, 1, 1], [], []>} : vector<16x64xf32>, vector<64x32xf32>, vector<16x32xf32> -> vector<16x32xf32>
    %cst_92 = arith.constant dense<0.000000e+00> : vector<16xf32>
    %103 = vector.multi_reduction <add>, %102, %cst_92 [1] : vector<16x32xf32> to vector<16xf32>
    %104 = vector.shape_cast %103 : vector<16xf32> to vector<16x1xf32>
    %cst_93 = arith.constant 3.200000e+01 : f32
    %105 = vector.broadcast %cst_93 : f32 to vector<16x1xf32>
    %106 = arith.divf %104, %105 : vector<16x1xf32>
    %107 = vector.broadcast %106 : vector<16x1xf32> to vector<16x32xf32>
    %108 = arith.subf %102, %107 : vector<16x32xf32>
    %109 = arith.mulf %108, %108 : vector<16x32xf32>
    %cst_94 = arith.constant dense<0.000000e+00> : vector<16xf32>
    %110 = vector.multi_reduction <add>, %109, %cst_94 [1] : vector<16x32xf32> to vector<16xf32>
    %111 = vector.shape_cast %110 : vector<16xf32> to vector<16x1xf32>
    %cst_95 = arith.constant 3.200000e+01 : f32
    %112 = vector.broadcast %cst_95 : f32 to vector<16x1xf32>
    %113 = arith.divf %111, %112 : vector<16x1xf32>
    %114 = vector.broadcast %106 : vector<16x1xf32> to vector<16x32xf32>
    %115 = arith.subf %102, %114 : vector<16x32xf32>
    %cst_96 = arith.constant 9.99999974E-6 : f32
    %116 = vector.broadcast %cst_96 : f32 to vector<16x1xf32>
    %117 = arith.addf %113, %116 : vector<16x1xf32>
    %118 = math.rsqrt %117 : vector<16x1xf32>
    %119 = vector.broadcast %118 : vector<16x1xf32> to vector<16x32xf32>
    %120 = arith.mulf %115, %119 : vector<16x32xf32>
    %121 = vector.broadcast %31 : vector<1x32xf32> to vector<16x32xf32>
    %122 = arith.mulf %120, %121 : vector<16x32xf32>
    %123 = vector.broadcast %33 : vector<1x32xf32> to vector<16x32xf32>
    %124 = arith.addf %122, %123 : vector<16x32xf32>
    %c0_97 = arith.constant 0 : index
    %c0_98 = arith.constant 0 : index
    %125 = vector.load %arg1[%c0_97, %c0_98] : memref<16x16xf32, #tpu.memory_space<vmem>>, vector<16x16xf32>
    %126 = tpu.iota {dimensions = array<i32: 0>} : vector<16x16xi32>
    %127 = tpu.iota {dimensions = array<i32: 1>} : vector<16x16xi32>
    %c7_i32 = arith.constant 7 : i32
    %128 = vector.broadcast %c7_i32 : i32 to vector<16x16xi32>
    %129 = arith.andi %127, %128 : vector<16x16xi32>
    %130 = arith.cmpi eq, %126, %129 : vector<16x16xi32>
    %131 = arith.extui %130 : vector<16x16xi1> to vector<16x16xi32>
    %132 = arith.sitofp %131 : vector<16x16xi32> to vector<16x16xf32>
    %c8_i32_99 = arith.constant 8 : i32
    %133 = vector.broadcast %c8_i32_99 : i32 to vector<16x16xi32>
    %134 = arith.addi %129, %133 : vector<16x16xi32>
    %135 = arith.cmpi eq, %126, %134 : vector<16x16xi32>
    %136 = arith.extui %135 : vector<16x16xi1> to vector<16x16xi32>
    %137 = arith.sitofp %136 : vector<16x16xi32> to vector<16x16xf32>
    %cst_100 = arith.constant dense<0.000000e+00> : vector<16x16xf32>
    %138 = tpu.matmul %125, %132, %cst_100 {dimension_numbers = #tpu.dot_dimension_numbers<[1], [0], [0], [1], [0, 0, 1, 1], [], []>} : vector<16x16xf32>, vector<16x16xf32>, vector<16x16xf32> -> vector<16x16xf32>
    %139 = arith.mulf %138, %94 : vector<16x16xf32>
    %cst_101 = arith.constant dense<0.000000e+00> : vector<16x16xf32>
    %140 = tpu.matmul %125, %137, %cst_101 {dimension_numbers = #tpu.dot_dimension_numbers<[1], [0], [0], [1], [0, 0, 1, 1], [], []>} : vector<16x16xf32>, vector<16x16xf32>, vector<16x16xf32> -> vector<16x16xf32>
    %141 = arith.mulf %140, %94 : vector<16x16xf32>
    %c0_102 = arith.constant 0 : index
    %c0_103 = arith.constant 0 : index
    %142 = vector.load %arg2[%c0_102, %c0_103] : memref<2x8xf32, #tpu.memory_space<vmem>>, vector<2x8xf32>
    %cst_104 = arith.constant dense<0.000000e+00> : vector<2xf32>
    %143 = vector.multi_reduction <add>, %142, %cst_104 [1] : vector<2x8xf32> to vector<2xf32>
    %144 = vector.shape_cast %143 : vector<2xf32> to vector<2x1xf32>
    %cst_105 = arith.constant dense<0.000000e+00> : vector<2x32xf32>
    %145 = tpu.matmul %93, %124, %cst_105 {dimension_numbers = #tpu.dot_dimension_numbers<[1], [0], [0], [1], [0, 0, 1, 1], [], []>} : vector<2x16xf32>, vector<16x32xf32>, vector<2x32xf32> -> vector<2x32xf32>
    %cst_106 = arith.constant 9.99999997E-7 : f32
    %146 = vector.broadcast %cst_106 : f32 to vector<2x1xf32>
    %147 = arith.addf %144, %146 : vector<2x1xf32>
    %148 = vector.broadcast %147 : vector<2x1xf32> to vector<2x32xf32>
    %149 = arith.divf %145, %148 : vector<2x32xf32>
    %cst_107 = arith.constant dense<0.000000e+00> : vector<16x32xf32>
    %150 = tpu.matmul %124, %27, %cst_107 {dimension_numbers = #tpu.dot_dimension_numbers<[1], [0], [0], [1], [0, 0, 1, 1], [], []>} : vector<16x32xf32>, vector<32x32xf32>, vector<16x32xf32> -> vector<16x32xf32>
    %151 = vector.broadcast %67 : vector<1x32xf32> to vector<16x32xf32>
    %152 = arith.addf %150, %151 : vector<16x32xf32>
    %cst_108 = arith.constant dense<0.000000e+00> : vector<2x32xf32>
    %153 = tpu.matmul %149, %21, %cst_108 {dimension_numbers = #tpu.dot_dimension_numbers<[1], [0], [0], [1], [0, 0, 1, 1], [], []>} : vector<2x32xf32>, vector<32x32xf32>, vector<2x32xf32> -> vector<2x32xf32>
    %154 = vector.broadcast %61 : vector<1x32xf32> to vector<2x32xf32>
    %155 = arith.addf %153, %154 : vector<2x32xf32>
    %cst_109 = arith.constant dense<0.000000e+00> : vector<2x32xf32>
    %156 = tpu.matmul %149, %25, %cst_109 {dimension_numbers = #tpu.dot_dimension_numbers<[1], [0], [0], [1], [0, 0, 1, 1], [], []>} : vector<2x32xf32>, vector<32x32xf32>, vector<2x32xf32> -> vector<2x32xf32>
    %157 = vector.broadcast %65 : vector<1x32xf32> to vector<2x32xf32>
    %158 = arith.addf %156, %157 : vector<2x32xf32>
    %cst_110 = arith.constant dense<0.000000e+00> : vector<16x32xf32>
    %159 = tpu.matmul %80, %149, %cst_110 {dimension_numbers = #tpu.dot_dimension_numbers<[1], [0], [0], [1], [0, 0, 1, 1], [], []>} : vector<16x2xf32>, vector<2x32xf32>, vector<16x32xf32> -> vector<16x32xf32>
    %cst_111 = arith.constant dense<0.000000e+00> : vector<16x32xf32>
    %160 = tpu.matmul %124, %1, %cst_111 {dimension_numbers = #tpu.dot_dimension_numbers<[1], [0], [0], [1], [0, 0, 1, 1], [], []>} : vector<16x32xf32>, vector<32x32xf32>, vector<16x32xf32> -> vector<16x32xf32>
    %161 = vector.broadcast %35 : vector<1x32xf32> to vector<16x32xf32>
    %162 = arith.addf %160, %161 : vector<16x32xf32>
    %cst_112 = arith.constant dense<0.000000e+00> : vector<16x32xf32>
    %163 = tpu.matmul %124, %3, %cst_112 {dimension_numbers = #tpu.dot_dimension_numbers<[1], [0], [0], [1], [0, 0, 1, 1], [], []>} : vector<16x32xf32>, vector<32x32xf32>, vector<16x32xf32> -> vector<16x32xf32>
    %164 = vector.broadcast %37 : vector<1x32xf32> to vector<16x32xf32>
    %165 = arith.addf %163, %164 : vector<16x32xf32>
    %cst_113 = arith.constant dense<0.000000e+00> : vector<16x32xf32>
    %166 = tpu.matmul %124, %5, %cst_113 {dimension_numbers = #tpu.dot_dimension_numbers<[1], [0], [0], [1], [0, 0, 1, 1], [], []>} : vector<16x32xf32>, vector<32x32xf32>, vector<16x32xf32> -> vector<16x32xf32>
    %167 = vector.broadcast %39 : vector<1x32xf32> to vector<16x32xf32>
    %168 = arith.addf %166, %167 : vector<16x32xf32>
    %cst_114 = arith.constant dense<0.000000e+00> : vector<16x32xf32>
    %169 = tpu.matmul %124, %7, %cst_114 {dimension_numbers = #tpu.dot_dimension_numbers<[1], [0], [0], [1], [0, 0, 1, 1], [], []>} : vector<16x32xf32>, vector<32x32xf32>, vector<16x32xf32> -> vector<16x32xf32>
    %170 = vector.broadcast %41 : vector<1x32xf32> to vector<16x32xf32>
    %171 = arith.addf %169, %170 : vector<16x32xf32>
    %cst_115 = arith.constant dense<0.000000e+00> : vector<16x32xf32>
    %172 = tpu.matmul %124, %9, %cst_115 {dimension_numbers = #tpu.dot_dimension_numbers<[1], [0], [0], [1], [0, 0, 1, 1], [], []>} : vector<16x32xf32>, vector<32x32xf32>, vector<16x32xf32> -> vector<16x32xf32>
    %173 = vector.broadcast %43 : vector<1x32xf32> to vector<16x32xf32>
    %174 = arith.addf %172, %173 : vector<16x32xf32>
    %cst_116 = arith.constant dense<0.000000e+00> : vector<16x32xf32>
    %175 = tpu.matmul %124, %11, %cst_116 {dimension_numbers = #tpu.dot_dimension_numbers<[1], [0], [0], [1], [0, 0, 1, 1], [], []>} : vector<16x32xf32>, vector<32x32xf32>, vector<16x32xf32> -> vector<16x32xf32>
    %176 = vector.broadcast %45 : vector<1x32xf32> to vector<16x32xf32>
    %177 = arith.addf %175, %176 : vector<16x32xf32>
    %cst_117 = arith.constant dense<0.000000e+00> : vector<16x32xf32>
    %178 = tpu.matmul %124, %13, %cst_117 {dimension_numbers = #tpu.dot_dimension_numbers<[1], [0], [0], [1], [0, 0, 1, 1], [], []>} : vector<16x32xf32>, vector<32x32xf32>, vector<16x32xf32> -> vector<16x32xf32>
    %179 = vector.broadcast %47 : vector<1x32xf32> to vector<16x32xf32>
    %180 = arith.addf %178, %179 : vector<16x32xf32>
    %cst_118 = arith.constant dense<0.000000e+00> : vector<16x32xf32>
    %181 = tpu.matmul %124, %15, %cst_118 {dimension_numbers = #tpu.dot_dimension_numbers<[1], [0], [0], [1], [0, 0, 1, 1], [], []>} : vector<16x32xf32>, vector<32x32xf32>, vector<16x32xf32> -> vector<16x32xf32>
    %182 = vector.broadcast %49 : vector<1x32xf32> to vector<16x32xf32>
    %183 = arith.addf %181, %182 : vector<16x32xf32>
    %cst_119 = arith.constant dense<0.000000e+00> : vector<16x32xf32>
    %184 = tpu.matmul %124, %17, %cst_119 {dimension_numbers = #tpu.dot_dimension_numbers<[1], [0], [0], [1], [0, 0, 1, 1], [], []>} : vector<16x32xf32>, vector<32x32xf32>, vector<16x32xf32> -> vector<16x32xf32>
    %185 = vector.broadcast %51 : vector<1x32xf32> to vector<16x32xf32>
    %186 = arith.addf %184, %185 : vector<16x32xf32>
    %cst_120 = arith.constant dense<0.000000e+00> : vector<16x32xf32>
    %187 = tpu.matmul %139, %162, %cst_120 {dimension_numbers = #tpu.dot_dimension_numbers<[1], [0], [0], [1], [0, 0, 1, 1], [], []>} : vector<16x16xf32>, vector<16x32xf32>, vector<16x32xf32> -> vector<16x32xf32>
    %cst_121 = arith.constant dense<0.000000e+00> : vector<16x32xf32>
    %188 = tpu.matmul %141, %171, %cst_121 {dimension_numbers = #tpu.dot_dimension_numbers<[1], [0], [0], [1], [0, 0, 1, 1], [], []>} : vector<16x16xf32>, vector<16x32xf32>, vector<16x32xf32> -> vector<16x32xf32>
    %189 = arith.addf %187, %188 : vector<16x32xf32>
    %190 = vector.broadcast %53 : vector<1x32xf32> to vector<16x32xf32>
    %191 = arith.addf %189, %190 : vector<16x32xf32>
    %cst_122 = arith.constant dense<0.000000e+00> : vector<16x32xf32>
    %192 = tpu.matmul %139, %165, %cst_122 {dimension_numbers = #tpu.dot_dimension_numbers<[1], [0], [0], [1], [0, 0, 1, 1], [], []>} : vector<16x16xf32>, vector<16x32xf32>, vector<16x32xf32> -> vector<16x32xf32>
    %cst_123 = arith.constant dense<0.000000e+00> : vector<16x32xf32>
    %193 = tpu.matmul %141, %174, %cst_123 {dimension_numbers = #tpu.dot_dimension_numbers<[1], [0], [0], [1], [0, 0, 1, 1], [], []>} : vector<16x16xf32>, vector<16x32xf32>, vector<16x32xf32> -> vector<16x32xf32>
    %194 = arith.addf %192, %193 : vector<16x32xf32>
    %195 = vector.broadcast %55 : vector<1x32xf32> to vector<16x32xf32>
    %196 = arith.addf %194, %195 : vector<16x32xf32>
    %cst_124 = arith.constant dense<0.000000e+00> : vector<16x32xf32>
    %197 = tpu.matmul %139, %168, %cst_124 {dimension_numbers = #tpu.dot_dimension_numbers<[1], [0], [0], [1], [0, 0, 1, 1], [], []>} : vector<16x16xf32>, vector<16x32xf32>, vector<16x32xf32> -> vector<16x32xf32>
    %cst_125 = arith.constant dense<0.000000e+00> : vector<16x32xf32>
    %198 = tpu.matmul %141, %177, %cst_125 {dimension_numbers = #tpu.dot_dimension_numbers<[1], [0], [0], [1], [0, 0, 1, 1], [], []>} : vector<16x16xf32>, vector<16x32xf32>, vector<16x32xf32> -> vector<16x32xf32>
    %199 = arith.addf %197, %198 : vector<16x32xf32>
    %200 = vector.broadcast %57 : vector<1x32xf32> to vector<16x32xf32>
    %201 = arith.addf %199, %200 : vector<16x32xf32>
    %202 = arith.addf %191, %180 : vector<16x32xf32>
    %203 = arith.negf %202 : vector<16x32xf32>
    %204 = math.exp %203 : vector<16x32xf32>
    %cst_126 = arith.constant 1.000000e+00 : f32
    %205 = vector.broadcast %cst_126 : f32 to vector<16x32xf32>
    %206 = arith.addf %205, %204 : vector<16x32xf32>
    %207 = arith.divf %205, %206 : vector<16x32xf32>
    %208 = arith.addf %196, %183 : vector<16x32xf32>
    %209 = arith.negf %208 : vector<16x32xf32>
    %210 = math.exp %209 : vector<16x32xf32>
    %cst_127 = arith.constant 1.000000e+00 : f32
    %211 = vector.broadcast %cst_127 : f32 to vector<16x32xf32>
    %212 = arith.addf %211, %210 : vector<16x32xf32>
    %213 = arith.divf %211, %212 : vector<16x32xf32>
    %214 = arith.mulf %207, %186 : vector<16x32xf32>
    %215 = arith.addf %201, %214 : vector<16x32xf32>
    %216 = math.tanh %215 : vector<16x32xf32>
    %217 = arith.subf %124, %216 : vector<16x32xf32>
    %218 = arith.mulf %213, %217 : vector<16x32xf32>
    %219 = arith.addf %216, %218 : vector<16x32xf32>
    %cst_128 = arith.constant dense<0.000000e+00> : vector<16x32xf32>
    %220 = tpu.matmul %219, %19, %cst_128 {dimension_numbers = #tpu.dot_dimension_numbers<[1], [0], [0], [1], [0, 0, 1, 1], [], []>} : vector<16x32xf32>, vector<32x32xf32>, vector<16x32xf32> -> vector<16x32xf32>
    %221 = vector.broadcast %59 : vector<1x32xf32> to vector<16x32xf32>
    %222 = arith.addf %220, %221 : vector<16x32xf32>
    %cst_129 = arith.constant dense<0.000000e+00> : vector<16x2xf32>
    %223 = tpu.matmul %222, %155, %cst_129 {dimension_numbers = #tpu.dot_dimension_numbers<[1], [1], [0], [0], [0, 0, 1, 0], [], []>} : vector<16x32xf32>, vector<2x32xf32>, vector<16x2xf32> -> vector<16x2xf32>
    %cst_130 = arith.constant 0.176776692 : f32
    %224 = vector.broadcast %cst_130 : f32 to vector<16x2xf32>
    %225 = arith.mulf %223, %224 : vector<16x2xf32>
    %cst_131 = arith.constant -1.000000e+30 : f32
    %226 = vector.broadcast %cst_131 : f32 to vector<16x2xf32>
    %227 = arith.select %78, %225, %226 : vector<16x2xi1>, vector<16x2xf32>
    %cst_132 = arith.constant dense<0xFF800000> : vector<2xf32>
    %228 = vector.multi_reduction <maximumf>, %227, %cst_132 [0] : vector<16x2xf32> to vector<2xf32>
    %229 = vector.shape_cast %228 : vector<2xf32> to vector<1x2xf32>
    %230 = vector.broadcast %229 : vector<1x2xf32> to vector<16x2xf32>
    %231 = arith.subf %227, %230 : vector<16x2xf32>
    %232 = math.exp %231 : vector<16x2xf32>
    %cst_133 = arith.constant dense<0.000000e+00> : vector<2xf32>
    %233 = vector.multi_reduction <add>, %232, %cst_133 [0] : vector<16x2xf32> to vector<2xf32>
    %234 = vector.shape_cast %233 : vector<2xf32> to vector<1x2xf32>
    %235 = vector.broadcast %234 : vector<1x2xf32> to vector<16x2xf32>
    %236 = arith.divf %232, %235 : vector<16x2xf32>
    %cst_134 = arith.constant dense<0.000000e+00> : vector<16xf32>
    %237 = vector.multi_reduction <add>, %236, %cst_134 [1] : vector<16x2xf32> to vector<16xf32>
    %238 = vector.shape_cast %237 : vector<16xf32> to vector<16x1xf32>
    %cst_135 = arith.constant 1.000000e+00 : f32
    %239 = vector.broadcast %cst_135 : f32 to vector<16x1xf32>
    %240 = arith.subf %239, %238 : vector<16x1xf32>
    %241 = vector.broadcast %240 : vector<16x1xf32> to vector<16x32xf32>
    %242 = arith.mulf %241, %219 : vector<16x32xf32>
    %243 = vector.broadcast %238 : vector<16x1xf32> to vector<16x32xf32>
    %244 = arith.mulf %243, %159 : vector<16x32xf32>
    %245 = arith.addf %242, %244 : vector<16x32xf32>
    %cst_136 = arith.constant dense<0.000000e+00> : vector<16x32xf32>
    %246 = tpu.matmul %245, %23, %cst_136 {dimension_numbers = #tpu.dot_dimension_numbers<[1], [0], [0], [1], [0, 0, 1, 1], [], []>} : vector<16x32xf32>, vector<32x32xf32>, vector<16x32xf32> -> vector<16x32xf32>
    %247 = vector.broadcast %63 : vector<1x32xf32> to vector<16x32xf32>
    %248 = arith.addf %246, %247 : vector<16x32xf32>
    %cst_137 = arith.constant dense<0.000000e+00> : vector<16x2xf32>
    %249 = tpu.matmul %248, %158, %cst_137 {dimension_numbers = #tpu.dot_dimension_numbers<[1], [1], [0], [0], [0, 0, 1, 0], [], []>} : vector<16x32xf32>, vector<2x32xf32>, vector<16x2xf32> -> vector<16x2xf32>
    %cst_138 = arith.constant 0.176776692 : f32
    %250 = vector.broadcast %cst_138 : f32 to vector<16x2xf32>
    %251 = arith.mulf %249, %250 : vector<16x2xf32>
    %cst_139 = arith.constant -1.000000e+30 : f32
    %252 = vector.broadcast %cst_139 : f32 to vector<16x2xf32>
    %253 = arith.select %78, %251, %252 : vector<16x2xi1>, vector<16x2xf32>
    %cst_140 = arith.constant dense<0xFF800000> : vector<2xf32>
    %254 = vector.multi_reduction <maximumf>, %253, %cst_140 [0] : vector<16x2xf32> to vector<2xf32>
    %255 = vector.shape_cast %254 : vector<2xf32> to vector<1x2xf32>
    %256 = vector.broadcast %255 : vector<1x2xf32> to vector<16x2xf32>
    %257 = arith.subf %253, %256 : vector<16x2xf32>
    %258 = math.exp %257 : vector<16x2xf32>
    %cst_141 = arith.constant dense<0.000000e+00> : vector<2xf32>
    %259 = vector.multi_reduction <add>, %258, %cst_141 [0] : vector<16x2xf32> to vector<2xf32>
    %260 = vector.shape_cast %259 : vector<2xf32> to vector<1x2xf32>
    %261 = vector.broadcast %260 : vector<1x2xf32> to vector<16x2xf32>
    %262 = arith.divf %258, %261 : vector<16x2xf32>
    %cst_142 = arith.constant dense<0.000000e+00> : vector<16xf32>
    %263 = vector.multi_reduction <add>, %262, %cst_142 [1] : vector<16x2xf32> to vector<16xf32>
    %264 = vector.shape_cast %263 : vector<16xf32> to vector<16x1xf32>
    %265 = vector.broadcast %264 : vector<16x1xf32> to vector<16x32xf32>
    %266 = arith.mulf %265, %245 : vector<16x32xf32>
    %cst_143 = arith.constant dense<0.000000e+00> : vector<2x32xf32>
    %267 = tpu.matmul %93, %266, %cst_143 {dimension_numbers = #tpu.dot_dimension_numbers<[1], [0], [0], [1], [0, 0, 1, 1], [], []>} : vector<2x16xf32>, vector<16x32xf32>, vector<2x32xf32> -> vector<2x32xf32>
    %cst_144 = arith.constant dense<0.000000e+00> : vector<16x32xf32>
    %268 = tpu.matmul %245, %29, %cst_144 {dimension_numbers = #tpu.dot_dimension_numbers<[1], [0], [0], [1], [0, 0, 1, 1], [], []>} : vector<16x32xf32>, vector<32x32xf32>, vector<16x32xf32> -> vector<16x32xf32>
    %269 = arith.addf %152, %268 : vector<16x32xf32>
    %270 = arith.negf %269 : vector<16x32xf32>
    %271 = math.exp %270 : vector<16x32xf32>
    %cst_145 = arith.constant 1.000000e+00 : f32
    %272 = vector.broadcast %cst_145 : f32 to vector<16x32xf32>
    %273 = arith.addf %272, %271 : vector<16x32xf32>
    %274 = arith.divf %272, %273 : vector<16x32xf32>
    %275 = arith.mulf %274, %124 : vector<16x32xf32>
    %cst_146 = arith.constant 1.000000e+00 : f32
    %276 = vector.broadcast %cst_146 : f32 to vector<16x32xf32>
    %277 = arith.subf %276, %274 : vector<16x32xf32>
    %278 = arith.mulf %277, %245 : vector<16x32xf32>
    %279 = arith.addf %275, %278 : vector<16x32xf32>
    %c0_147 = arith.constant 0 : index
    %c0_148 = arith.constant 0 : index
    %280 = vector.load %arg6[%c0_147, %c0_148] : memref<16x32xf32, #tpu.memory_space<vmem>>, vector<16x32xf32>
    tpu.vector_store %arg6[%c0_147, %c0_148], %279 {strides = array<i32>} : memref<16x32xf32, #tpu.memory_space<vmem>>, vector<16x32xf32>,
    %c0_149 = arith.constant 0 : index
    %c0_150 = arith.constant 0 : index
    %281 = vector.load %arg7[%c0_149, %c0_150] : memref<2x32xf32, #tpu.memory_space<vmem>>, vector<2x32xf32>
    tpu.vector_store %arg7[%c0_149, %c0_150], %267 {strides = array<i32>} : memref<2x32xf32, #tpu.memory_space<vmem>>, vector<2x32xf32>,
    return
  }
}

</mosaic_0001>

<llo_original>
// kernel: star_session_graph_forward.1
$region0: #{star_session_graph_forward.1}
  #allocation0 [shape = 'u32[]', space=smem, size = 0x4, offset = 0x4, fixed_abs, tag = 'smem constant byte address 0x4 - core index']
  #allocation1 [shape = 'u32[72,128]{1,0:T(1,128)}', space=vmem, size = 0x9000, scoped, tag = 'internal scratch']
  %s0 = inlined_call_operand.vmem [shape: s32[16,1], index: 0, kind: input, shape index: {}]
  %s1 = inlined_call_operand.vmem [shape: f32[16,16], index: 1, kind: input, shape index: {}]
  %s2 = inlined_call_operand.vmem [shape: f32[2,8], index: 2, kind: input, shape index: {}]
  %s3 = inlined_call_operand.vmem [shape: f32[64,32], index: 3, kind: input, shape index: {}]
  %s4 = inlined_call_operand.hbm [shape: f32[15,32,32], index: 4, kind: input, shape index: {}]
  %s5 = inlined_call_operand.vmem [shape: f32[19,1,32], index: 5, kind: input, shape index: {}]
  %s6 = inlined_call_operand.hbm [shape: f32[16,32], index: 6, kind: output, shape index: {0}]
  %s7 = inlined_call_operand.hbm [shape: f32[2,32], index: 7, kind: output, shape index: {1}]
  %8 = xla_tuple %s6, %s7
  %s9 = sld [smem:[#allocation0]]
  $region46: #{star_session_graph_forward.1} parent=0
    _
  %s11 = ssub.s32 1, %s9
  %s12 = scalar_select 0, %s11, %s9
  $region1: #{star_session_graph_forward.1} parent=0
    #allocation2 [shape = 'u8[245760]{0}', space=vmem, size = 0x3c000, scoped, tag = 'input window, operand 4, single buffered']
    #allocation3 [shape = 's32[1]{0}', space=sflag, size = 0x4, scoped, tag = 'scoped memory for star_session_graph_forward.1']
    #allocation4 [shape = 's32[1]{0}', space=sflag, size = 0x4, scoped, tag = 'scoped memory for star_session_graph_forward.1']
    #allocation5 [shape = 'u8[8192]{0}', space=vmem, size = 0x2000, scoped, tag = 'output window, operand 0, single buffered']
    #allocation6 [shape = 'u8[1024]{0}', space=vmem, size = 0x400, scoped, tag = 'output window, operand 1, single buffered']
    #allocation7 [shape = 's32[1]{0}', space=sflag, size = 0x4, scoped, tag = 'scoped memory for star_session_graph_forward.1']
    %13 = vsyncpa [#allocation3], 0
    %14 = vsyncpa [#allocation4], 0
    %15 = vsyncpa [#allocation7], 0
    // Predicated region
    $region2: #{star_session_graph_forward.1} parent=1 // pred_check
      _
    $region3: #{star_session_graph_forward.1} parent=1 // pred_check_branch
      %17 = sbr.rel (0) target = $region5
    $region4: #{star_session_graph_forward.1} parent=1 // pred_region
      _
    $region5: #{star_session_graph_forward.1} parent=1 // pred_fallthru
      _
    // Predicated region
    $region6: #{star_session_graph_forward.1} parent=1 // pred_check
      _
    $region7: #{star_session_graph_forward.1} parent=1 // pred_check_branch
      %19 = sbr.rel (0) target = $region9
    $region8: #{star_session_graph_forward.1} parent=1 // pred_region
      _
    $region9: #{star_session_graph_forward.1} parent=1 // pred_fallthru
      _
    // Predicated region
    $region10: #{star_session_graph_forward.1} parent=1 // pred_check
      _
    $region11: #{star_session_graph_forward.1} parent=1 // pred_check_branch
      %21 = sbr.rel (0) target = $region13
    $region12: #{star_session_graph_forward.1} parent=1 // pred_region
      _
    $region13: #{star_session_graph_forward.1} parent=1 // pred_fallthru
      _
    // Predicated region
    $region14: #{star_session_graph_forward.1} parent=1 // pred_check
      _
    $region15: #{star_session_graph_forward.1} parent=1 // pred_check_branch
      %23 = sbr.rel (0) target = $region17
    $region16: #{star_session_graph_forward.1} parent=1 // pred_region
      _
    $region17: #{star_session_graph_forward.1} parent=1 // pred_fallthru
      _
    // Predicated region
    $region18: #{star_session_graph_forward.1} parent=1 // pred_check
      _
    $region19: #{star_session_graph_forward.1} parent=1 // pred_check_branch
      %25 = sbr.rel (0) target = $region21
    $region20: #{star_session_graph_forward.1} parent=1 // pred_region
      %27 = vsyncadd [#allocation3], 0
      %s28 = sshll.u32 %s4, 4
      %s29 = int_to_ptr.hbm [resolvable:$true] %s28
      %s30 = sshll.u32 [#allocation2], 4
      %s31 = int_to_ptr.vmem [resolvable:$true] %s30
      %36 = dma.hbm_to_vmem [thread:$0]  %s29, 7680, %s31, [#allocation3], 128, 128, 8
    $region21: #{star_session_graph_forward.1} parent=1 // pred_fallthru
      _
    // Predicated region
    $region22: #{star_session_graph_forward.1} parent=1 // pred_check
      _
    $region23: #{star_session_graph_forward.1} parent=1 // pred_check_branch
      %38 = sbr.rel (0) target = $region25
    $region24: #{star_session_graph_forward.1} parent=1 // pred_region
      _
    $region25: #{star_session_graph_forward.1} parent=1 // pred_fallthru
      _
    // Predicated region
    $region26: #{star_session_graph_forward.1} parent=1 // pred_check
      _
    $region27: #{star_session_graph_forward.1} parent=1 // pred_check_branch
      %40 = sbr.rel (0) target = $region29
    $region28: #{star_session_graph_forward.1} parent=1 // pred_region
      %42 = dma.done [#allocation3], 7680
    $region29: #{star_session_graph_forward.1} parent=1 // pred_fallthru
      _
    %v43 = vld [vmem:[#allocation2] sm:$0xff]
    %v44 = vld [vmem:[#allocation2 + $0x8] sm:$0xff]
    %v45 = vld [vmem:[#allocation2 + $0x10] sm:$0xff]
    %v46 = vld [vmem:[#allocation2 + $0x18] sm:$0xff]
    %s47 = scalar_lea.vmem [#allocation2], 32
    %v48 = vld [vmem:[%s47] sm:$0xff]
    %v49 = vld [vmem:[%s47 + $0x8] sm:$0xff]
    %v50 = vld [vmem:[%s47 + $0x10] sm:$0xff]
    %v51 = vld [vmem:[%s47 + $0x18] sm:$0xff]
    %s52 = scalar_lea.vmem [#allocation2], 64
    %v53 = vld [vmem:[%s52] sm:$0xff]
    %v54 = vld [vmem:[%s52 + $0x8] sm:$0xff]
    %v55 = vld [vmem:[%s52 + $0x10] sm:$0xff]
    %v56 = vld [vmem:[%s52 + $0x18] sm:$0xff]
    %s57 = scalar_lea.vmem [#allocation2], 96
    %v58 = vld [vmem:[%s57] sm:$0xff]
    %v59 = vld [vmem:[%s57 + $0x8] sm:$0xff]
    %v60 = vld [vmem:[%s57 + $0x10] sm:$0xff]
    %v61 = vld [vmem:[%s57 + $0x18] sm:$0xff]
    %s62 = scalar_lea.vmem [#allocation2], 128
    %v63 = vld [vmem:[%s62] sm:$0xff]
    %v64 = vld [vmem:[%s62 + $0x8] sm:$0xff]
    %v65 = vld [vmem:[%s62 + $0x10] sm:$0xff]
    %v66 = vld [vmem:[%s62 + $0x18] sm:$0xff]
    %s67 = scalar_lea.vmem [#allocation2], 160
    %v68 = vld [vmem:[%s67] sm:$0xff]
    %v69 = vld [vmem:[%s67 + $0x8] sm:$0xff]
    %v70 = vld [vmem:[%s67 + $0x10] sm:$0xff]
    %v71 = vld [vmem:[%s67 + $0x18] sm:$0xff]
    %s72 = scalar_lea.vmem [#allocation2], 192
    %v73 = vld [vmem:[%s72] sm:$0xff]
    %v74 = vld [vmem:[%s72 + $0x8] sm:$0xff]
    %v75 = vld [vmem:[%s72 + $0x10] sm:$0xff]
    %v76 = vld [vmem:[%s72 + $0x18] sm:$0xff]
    %s77 = scalar_lea.vmem [#allocation2], 224
    %v78 = vld [vmem:[%s77] sm:$0xff]
    %v79 = vld [vmem:[%s77 + $0x8] sm:$0xff]
    %v80 = vld [vmem:[%s77 + $0x10] sm:$0xff]
    %v81 = vld [vmem:[%s77 + $0x18] sm:$0xff]
    %s82 = scalar_lea.vmem [#allocation2], 256
    %v83 = vld [vmem:[%s82] sm:$0xff]
    %v84 = vld [vmem:[%s82 + $0x8] sm:$0xff]
    %v85 = vld [vmem:[%s82 + $0x10] sm:$0xff]
    %v86 = vld [vmem:[%s82 + $0x18] sm:$0xff]
    %s87 = scalar_lea.vmem [#allocation2], 288
    %v88 = vld [vmem:[%s87] sm:$0xff]
    %v89 = vld [vmem:[%s87 + $0x8] sm:$0xff]
    %v90 = vld [vmem:[%s87 + $0x10] sm:$0xff]
    %v91 = vld [vmem:[%s87 + $0x18] sm:$0xff]
    %s92 = scalar_lea.vmem [#allocation2], 320
    %v93 = vld [vmem:[%s92] sm:$0xff]
    %v94 = vld [vmem:[%s92 + $0x8] sm:$0xff]
    %v95 = vld [vmem:[%s92 + $0x10] sm:$0xff]
    %v96 = vld [vmem:[%s92 + $0x18] sm:$0xff]
    %s97 = scalar_lea.vmem [#allocation2], 352
    %v98 = vld [vmem:[%s97] sm:$0xff]
    %v99 = vld [vmem:[%s97 + $0x8] sm:$0xff]
    %v100 = vld [vmem:[%s97 + $0x10] sm:$0xff]
    %v101 = vld [vmem:[%s97 + $0x18] sm:$0xff]
    %s102 = scalar_lea.vmem [#allocation2], 384
    %v103 = vld [vmem:[%s102] sm:$0xff]
    %v104 = vld [vmem:[%s102 + $0x8] sm:$0xff]
    %v105 = vld [vmem:[%s102 + $0x10] sm:$0xff]
    %v106 = vld [vmem:[%s102 + $0x18] sm:$0xff]
    %s107 = scalar_lea.vmem [#allocation2], 416
    %v108 = vld [vmem:[%s107] sm:$0xff]
    %v109 = vld [vmem:[%s107 + $0x8] sm:$0xff]
    %v110 = vld [vmem:[%s107 + $0x10] sm:$0xff]
    %v111 = vld [vmem:[%s107 + $0x18] sm:$0xff]
    %s112 = scalar_lea.vmem [#allocation2], 448
    %v113 = vld [vmem:[%s112] sm:$0xff]
    %v114 = vld [vmem:[%s112 + $0x8] sm:$0xff]
    %v115 = vld [vmem:[%s112 + $0x10] sm:$0xff]
    %v116 = vld [vmem:[%s112 + $0x18] sm:$0xff]
    %v117 = vld [vmem:[%s5] sm:$0x1]
    %s118 = scalar_lea.vmem %s5, 1
    %v119 = vld [vmem:[%s118] sm:$0x1]
    %s120 = scalar_lea.vmem %s5, 2
    %v121 = vld [vmem:[%s120] sm:$0x1]
    %s122 = scalar_lea.vmem %s5, 3
    %v123 = vld [vmem:[%s122] sm:$0x1]
    %s124 = scalar_lea.vmem %s5, 4
    %v125 = vld [vmem:[%s124] sm:$0x1]
    %s126 = scalar_lea.vmem %s5, 5
    %v127 = vld [vmem:[%s126] sm:$0x1]
    %s128 = scalar_lea.vmem %s5, 6
    %v129 = vld [vmem:[%s128] sm:$0x1]
    %s130 = scalar_lea.vmem %s5, 7
    %v131 = vld [vmem:[%s130] sm:$0x1]
    %s132 = scalar_lea.vmem %s5, 8
    %v133 = vld [vmem:[%s132] sm:$0x1]
    %s134 = scalar_lea.vmem %s5, 9
    %v135 = vld [vmem:[%s134] sm:$0x1]
    %s136 = scalar_lea.vmem %s5, 10
    %v137 = vld [vmem:[%s136] sm:$0x1]
    %s138 = scalar_lea.vmem %s5, 11
    %v139 = vld [vmem:[%s138] sm:$0x1]
    %s140 = scalar_lea.vmem %s5, 12
    %v141 = vld [vmem:[%s140] sm:$0x1]
    %s142 = scalar_lea.vmem %s5, 13
    %v143 = vld [vmem:[%s142] sm:$0x1]
    %s144 = scalar_lea.vmem %s5, 14
    %v145 = vld [vmem:[%s144] sm:$0x1]
    %s146 = scalar_lea.vmem %s5, 15
    %v147 = vld [vmem:[%s146] sm:$0x1]
    %s148 = scalar_lea.vmem %s5, 16
    %v149 = vld [vmem:[%s148] sm:$0x1]
    %s150 = scalar_lea.vmem %s5, 17
    %v151 = vld [vmem:[%s150] sm:$0x1]
    %s152 = scalar_lea.vmem %s5, 18
    %v153 = vld [vmem:[%s152] sm:$0x1]
    %v154 = vlaneseq
    %v155 = vshrl.u32 %v154, 7
    %v156 = vadd.s32 %v155, 8
    %v157 = vlaneseq
    %v158 = vand.u32 %v157, 127
    %v159 = vmul.u32 %v158, 8
    %vm160 = vcmp.ge.s32.totalorder %v155, %v159
    %vm161 = vcmp.ge.s32.totalorder %v156, %v159
    %v162 = vadd.s32 %v158, 1
    %v163 = vmul.u32 %v162, 8
    %vm164 = vcmp.lt.s32.totalorder %v155, %v163
    %vm165 = vcmp.lt.s32.totalorder %v156, %v163
    %vm166 = vmand %vm160, %vm164
    %vm167 = vmand %vm161, %vm165
    %v168 = vsel %vm166, 1, 0
    %v169 = vsel %vm167, 1, 0
    %v170 = vcvt.s32.f32 %v168
    %v171 = vcvt.s32.f32 %v169
    %v172 = vmul.u32 %v155, 8
    %vm173 = vcmp.ge.s32.totalorder %v158, %v172
    %v174 = vadd.s32 %v155, 1
    %v175 = vmul.u32 %v174, 8
    %vm176 = vcmp.lt.s32.totalorder %v158, %v175
    %vm177 = vmand %vm173, %vm176
    %v178 = vsel %vm177, 1, 0
    %v179 = vcvt.s32.f32 %v178
    %vm180 = vcmask 15360
    %v182 = vsel %vm180, %v170, 0
    %v185 = vsel %vm180, %v171, 0
    %vm187 = vcmask 1041408
    %v189 = vsel %vm187, %v179, 0
    %191 = vmatpush.msra.mxu0 0.0
    %192 = vmatpush.msra.mxu0 0.0
    %193 = vmatpush.msra.mxu0 0.0
    %194 = vmatpush.msra.mxu0 0.0
    %195 = vmatpush.msra.mxu0 0.0
    %196 = vmatpush.msra.mxu0 0.0
    %197 = vmatpush.msra.mxu0 0.0
    %198 = vmatpush.msra.mxu0 0.0
    %199 = vmatpush.msra.mxu0 0.0
    %200 = vmatpush.msra.mxu0 0.0
    %201 = vmatpush.msra.mxu0 0.0
    %202 = vmatpush.msra.mxu0 0.0
    %203 = vmatpush.msra.mxu0 0.0
    %204 = vmatpush.msra.mxu0 0.0
    %205 = vmatpush.msra.mxu0 0.0
    %206 = vmatpush.msra.mxu0 %v189
    %207 = vmatmul.f32.gmra.mxu0 %v182
    %v208 = vpop.f32.mrf.mxu0
    %v209 = vadd.f32 0.0, %v208
    %210 = vmatmul.f32.gmra.mxu0 %v185
    %v211 = vpop.f32.mrf.mxu0
    %v212 = vadd.f32 0.0, %v211
    %213 = vdwg.mxu0
    %v214 = vld [vmem:[%s0] sm:$0xff]
    %v215 = vld [vmem:[%s0 + $0x8] sm:$0xff]
    %216 = vset.pattern.permute.xlu0 0
    %217 = vperm.xlu0 %216, %v214
    %v218 = vpop.permute.xlu0 %217
    %219 = vset.pattern.permute.xlu0 0
    %220 = vperm.xlu0 %219, %v215
    %v221 = vpop.permute.xlu0 %220
    %vm222 = vcmp.eq.s32.totalorder %v158, %v218
    %vm223 = vcmp.eq.s32.totalorder %v158, %v221
    %v224 = vsel %vm222, 1, 0
    %v225 = vsel %vm223, 1, 0
    %v226 = vcvt.s32.f32 %v224
    %v227 = vcvt.s32.f32 %v225
    %v228 = vld [vmem:[%s3] sm:$0xff]
    %v229 = vld [vmem:[%s3 + $0x8] sm:$0xff]
    %v230 = vld [vmem:[%s3 + $0x10] sm:$0xff]
    %v231 = vld [vmem:[%s3 + $0x18] sm:$0xff]
    %v232 = vld [vmem:[%s3 + $0x20] sm:$0xff]
    %v233 = vld [vmem:[%s3 + $0x28] sm:$0xff]
    %v234 = vld [vmem:[%s3 + $0x30] sm:$0xff]
    %v235 = vld [vmem:[%s3 + $0x38] sm:$0xff]
    %vm236 = vcmask 523264
    %v238 = vsel %vm236, %v226, 0
    %v241 = vsel %vm236, %v227, 0
    %243 = vmatpush.msra.mxu0 0.0
    %244 = vmatpush.msra.mxu0 0.0
    %245 = vmatpush.msra.mxu0 0.0
    %246 = vmatpush.msra.mxu0 0.0
    %247 = vmatpush.msra.mxu0 0.0
    %248 = vmatpush.msra.mxu0 0.0
    %249 = vmatpush.msra.mxu0 0.0
    %250 = vmatpush.msra.mxu0 0.0
    %251 = vmatpush.msra.mxu0 %v235
    %252 = vmatpush.msra.mxu0 %v234
    %253 = vmatpush.msra.mxu0 %v233
    %254 = vmatpush.msra.mxu0 %v232
    %255 = vmatpush.msra.mxu0 %v231
    %256 = vmatpush.msra.mxu0 %v230
    %257 = vmatpush.msra.mxu0 %v229
    %258 = vmatpush.msra.mxu0 %v228
    %259 = vmatmul.f32.gmra.mxu0 %v238
    %v260 = vpop.f32.mrf.mxu0
    %v261 = vadd.f32 0.0, %v260
    %262 = vmatmul.f32.gmra.mxu0 %v241
    %v263 = vpop.f32.mrf.mxu0
    %v264 = vadd.f32 0.0, %v263
    %265 = vdwg.mxu0
    %vm266 = vcmask 261120
    %v267 = vsel %vm266, %v261, 0.0
    %268 = vadd.xlane.f32.xlu0 %v267
    %v269 = vpop.xlane.xlu0 %268
    %v270 = vsel %vm266, %v264, 0.0
    %271 = vadd.xlane.f32.xlu0 %v270
    %v272 = vpop.xlane.xlu0 %271
    %v273 = vrcp.pop 32.0
    %v274 = vmul.f32 32.0, %v273
    %v275 = vsub.f32 1.0, %v274
    %v276 = vmul.f32 %v273, %v275
    %v277 = vadd.f32 %v273, %v276
    %vm278 = vweird.f32 %v273
    %v279 = vsel %vm278, %v273, %v277
    %v280 = vmul.f32 %v269, %v279
    %v281 = vmul.f32 %v272, %v279
    %v282 = vsub.f32 %v261, %v280
    %v283 = vsub.f32 %v264, %v281
    %v284 = vmul.f32 %v282, %v282
    %v285 = vmul.f32 %v283, %v283
    %v286 = vsel %vm266, %v284, 0.0
    %287 = vadd.xlane.f32.xlu0 %v286
    %v288 = vpop.xlane.xlu0 %287
    %v289 = vsel %vm266, %v285, 0.0
    %290 = vadd.xlane.f32.xlu0 %v289
    %v291 = vpop.xlane.xlu0 %290
    %v292 = vmul.f32 %v288, %v279
    %v293 = vmul.f32 %v291, %v279
    %v294 = vadd.f32 %v292, 1e-05
    %v295 = vadd.f32 %v293, 1e-05
    %v296 = vrsqrt.pop %v294
    %v297 = vmul.f32 %v296, %v294
    %v298 = vmul.f32 %v297, %v296
    %v299 = vmul.f32 0.5, %v298
    %v300 = vsub.f32 1.5, %v299
    %v301 = vmul.f32 %v296, %v300
    %vm302 = vweird.f32 %v294
    %vm303 = vweird.f32 %v296
    %vm304 = vmor %vm302, %vm303
    %v305 = vsel %vm304, %v296, %v301
    %v306 = vrsqrt.pop %v295
    %v307 = vmul.f32 %v306, %v295
    %v308 = vmul.f32 %v307, %v306
    %v309 = vmul.f32 0.5, %v308
    %v310 = vsub.f32 1.5, %v309
    %v311 = vmul.f32 %v306, %v310
    %vm312 = vweird.f32 %v295
    %vm313 = vweird.f32 %v306
    %vm314 = vmor %vm312, %vm313
    %v315 = vsel %vm314, %v306, %v311
    %v316 = vmul.f32 %v282, %v305
    %v317 = vmul.f32 %v283, %v315
    %v319 = vperm.slane %v117, 0
    %v321 = vmul.f32 %v316, %v319
    %v322 = vmul.f32 %v317, %v319
    %v324 = vperm.slane %v119, 0
    %v326 = vadd.f32 %v321, %v324
    %v327 = vadd.f32 %v322, %v324
    %v328 = vld [vmem:[%s1] sm:$0xff]
    %v329 = vld [vmem:[%s1 + $0x8] sm:$0xff]
    %v330 = vand.u32 %v158, 7
    %vm331 = vcmp.eq.s32.totalorder %v155, %v330
    %vm332 = vcmp.eq.s32.totalorder %v156, %v330
    %v333 = vsel %vm331, 1, 0
    %v334 = vsel %vm332, 1, 0
    %v335 = vcvt.s32.f32 %v333
    %v336 = vcvt.s32.f32 %v334
    %v337 = vadd.s32 %v330, 8
    %vm338 = vcmp.eq.s32.totalorder %v155, %v337
    %vm339 = vcmp.eq.s32.totalorder %v156, %v337
    %v340 = vsel %vm338, 1, 0
    %v341 = vsel %vm339, 1, 0
    %v342 = vcvt.s32.f32 %v340
    %v343 = vcvt.s32.f32 %v341
    %vm344 = vcmask 130048
    %v346 = vsel %vm344, %v328, 0
    %v349 = vsel %vm344, %v329, 0
    %351 = vmatpush.msra.mxu0 0.0
    %352 = vmatpush.msra.mxu0 0.0
    %353 = vmatpush.msra.mxu0 0.0
    %354 = vmatpush.msra.mxu0 0.0
    %355 = vmatpush.msra.mxu0 0.0
    %356 = vmatpush.msra.mxu0 0.0
    %357 = vmatpush.msra.mxu0 0.0
    %358 = vmatpush.msra.mxu0 0.0
    %359 = vmatpush.msra.mxu0 0.0
    %360 = vmatpush.msra.mxu0 0.0
    %361 = vmatpush.msra.mxu0 0.0
    %362 = vmatpush.msra.mxu0 0.0
    %363 = vmatpush.msra.mxu0 0.0
    %364 = vmatpush.msra.mxu0 0.0
    %365 = vmatpush.msra.mxu0 %v336
    %366 = vmatpush.msra.mxu0 %v335
    %367 = vmatmul.f32.gmra.mxu0 %v346
    %v368 = vpop.f32.mrf.mxu0
    %v369 = vadd.f32 0.0, %v368
    %370 = vmatmul.f32.gmra.mxu0 %v349
    %v371 = vpop.f32.mrf.mxu0
    %v372 = vadd.f32 0.0, %v371
    %373 = vdwg.mxu0
    %v374 = vmul.f32 %v369, %v209
    %v375 = vmul.f32 %v372, %v212
    %376 = vmatpush.msra.mxu0 0.0
    %377 = vmatpush.msra.mxu0 0.0
    %378 = vmatpush.msra.mxu0 0.0
    %379 = vmatpush.msra.mxu0 0.0
    %380 = vmatpush.msra.mxu0 0.0
    %381 = vmatpush.msra.mxu0 0.0
    %382 = vmatpush.msra.mxu0 0.0
    %383 = vmatpush.msra.mxu0 0.0
    %384 = vmatpush.msra.mxu0 0.0
    %385 = vmatpush.msra.mxu0 0.0
    %386 = vmatpush.msra.mxu0 0.0
    %387 = vmatpush.msra.mxu0 0.0
    %388 = vmatpush.msra.mxu0 0.0
    %389 = vmatpush.msra.mxu0 0.0
    %390 = vmatpush.msra.mxu0 %v343
    %391 = vmatpush.msra.mxu0 %v342
    %392 = vmatmul.f32.gmra.mxu0 %v346
    %v393 = vpop.f32.mrf.mxu0
    %v394 = vadd.f32 0.0, %v393
    %395 = vmatmul.f32.gmra.mxu0 %v349
    %v396 = vpop.f32.mrf.mxu0
    %v397 = vadd.f32 0.0, %v396
    %398 = vdwg.mxu0
    %v399 = vmul.f32 %v394, %v209
    %v400 = vmul.f32 %v397, %v212
    %v401 = vld [vmem:[%s2] sm:$0x3]
    %vm402 = vcmask 58368
    %v403 = vsel %vm402, %v401, 0.0
    %404 = vadd.xlane.f32.xlu0 %v403
    %v405 = vpop.xlane.xlu0 %404
    %v406 = vsel %vm344, %v179, 0
    %408 = vmatpush.msra.mxu0 0.0
    %409 = vmatpush.msra.mxu0 0.0
    %410 = vmatpush.msra.mxu0 0.0
    %411 = vmatpush.msra.mxu0 0.0
    %412 = vmatpush.msra.mxu0 0.0
    %413 = vmatpush.msra.mxu0 0.0
    %414 = vmatpush.msra.mxu0 0.0
    %415 = vmatpush.msra.mxu0 0.0
    %416 = vmatpush.msra.mxu0 0.0
    %417 = vmatpush.msra.mxu0 0.0
    %418 = vmatpush.msra.mxu0 0.0
    %419 = vmatpush.msra.mxu0 0.0
    %420 = vmatpush.msra.mxu0 0.0
    %421 = vmatpush.msra.mxu0 0.0
    %422 = vmatpush.msra.mxu0 %v327
    %423 = vmatpush.msra.mxu0 %v326
    %424 = vmatmul.f32.gmra.mxu0 %v406
    %v425 = vpop.f32.mrf.mxu0
    %v426 = vadd.f32 0.0, %v425
    %427 = vdwg.mxu0
    %v428 = vadd.f32 %v405, 1e-06
    %v429 = vrcp.pop %v428
    %v430 = vmul.f32 %v428, %v429
    %v431 = vsub.f32 1.0, %v430
    %v432 = vmul.f32 %v429, %v431
    %v433 = vadd.f32 %v429, %v432
    %vm434 = vweird.f32 %v428
    %vm435 = vweird.f32 %v429
    %vm436 = vmor %vm434, %vm435
    %v437 = vsel %vm436, %v429, %v433
    %v438 = vand.u32 2147483647, %v428
    %vm439 = vcmp.eq.f32.partialorder %v438, 8.507059e+37
    %v440 = vand.u32 %v428, 2147483648
    %v441 = vor.u32 1.1754944e-38, %v440
    %v442 = vsel %vm439, %v441, %v437
    %v443 = vmul.f32 %v426, %v442
    %v445 = vperm.slane %v153, 0
    %v448 = vsel %vm266, %v326, 0
    %v451 = vsel %vm266, %v327, 0
    %453 = vmatpush.msra.mxu0 0.0
    %454 = vmatpush.msra.mxu0 0.0
    %455 = vmatpush.msra.mxu0 0.0
    %456 = vmatpush.msra.mxu0 0.0
    %457 = vmatpush.msra.mxu0 0.0
    %458 = vmatpush.msra.mxu0 0.0
    %459 = vmatpush.msra.mxu0 0.0
    %460 = vmatpush.msra.mxu0 0.0
    %461 = vmatpush.msra.mxu0 0.0
    %462 = vmatpush.msra.mxu0 0.0
    %463 = vmatpush.msra.mxu0 0.0
    %464 = vmatpush.msra.mxu0 0.0
    %465 = vmatpush.msra.mxu0 %v111
    %466 = vmatpush.msra.mxu0 %v110
    %467 = vmatpush.msra.mxu0 %v109
    %468 = vmatpush.msra.mxu0 %v108
    %469 = vmatmul.f32.gmra.mxu0 %v448
    %v470 = vpop.f32.mrf.mxu0
    %v471 = vadd.f32 %v445, %v470
    %472 = vmatmul.f32.gmra.mxu0 %v451
    %v473 = vpop.f32.mrf.mxu0
    %v474 = vadd.f32 %v445, %v473
    %475 = vdwg.mxu0
    %v477 = vperm.slane %v147, 0
    %v480 = vsel %vm266, %v443, 0
    %482 = vmatpush.msra.mxu0 0.0
    %483 = vmatpush.msra.mxu0 0.0
    %484 = vmatpush.msra.mxu0 0.0
    %485 = vmatpush.msra.mxu0 0.0
    %486 = vmatpush.msra.mxu0 0.0
    %487 = vmatpush.msra.mxu0 0.0
    %488 = vmatpush.msra.mxu0 0.0
    %489 = vmatpush.msra.mxu0 0.0
    %490 = vmatpush.msra.mxu0 0.0
    %491 = vmatpush.msra.mxu0 0.0
    %492 = vmatpush.msra.mxu0 0.0
    %493 = vmatpush.msra.mxu0 0.0
    %494 = vmatpush.msra.mxu0 %v96
    %495 = vmatpush.msra.mxu0 %v95
    %496 = vmatpush.msra.mxu0 %v94
    %497 = vmatpush.msra.mxu0 %v93
    %498 = vmatmul.f32.gmra.mxu0 %v480
    %v499 = vpop.f32.mrf.mxu0
    %v500 = vadd.f32 %v477, %v499
    %501 = vdwg.mxu0
    %v503 = vperm.slane %v151, 0
    %505 = vmatpush.msra.mxu0 0.0
    %506 = vmatpush.msra.mxu0 0.0
    %507 = vmatpush.msra.mxu0 0.0
    %508 = vmatpush.msra.mxu0 0.0
    %509 = vmatpush.msra.mxu0 0.0
    %510 = vmatpush.msra.mxu0 0.0
    %511 = vmatpush.msra.mxu0 0.0
    %512 = vmatpush.msra.mxu0 0.0
    %513 = vmatpush.msra.mxu0 0.0
    %514 = vmatpush.msra.mxu0 0.0
    %515 = vmatpush.msra.mxu0 0.0
    %516 = vmatpush.msra.mxu0 0.0
    %517 = vmatpush.msra.mxu0 %v106
    %518 = vmatpush.msra.mxu0 %v105
    %519 = vmatpush.msra.mxu0 %v104
    %520 = vmatpush.msra.mxu0 %v103
    %521 = vmatmul.f32.gmra.mxu0 %v480
    %v522 = vpop.f32.mrf.mxu0
    %v523 = vadd.f32 %v503, %v522
    %524 = vdwg.mxu0
    %v525 = vsel %vm187, %v443, 0
    %527 = vmatpush.msra.mxu0 0.0
    %528 = vmatpush.msra.mxu0 0.0
    %529 = vmatpush.msra.mxu0 0.0
    %530 = vmatpush.msra.mxu0 0.0
    %531 = vmatpush.msra.mxu0 0.0
    %532 = vmatpush.msra.mxu0 0.0
    %533 = vmatpush.msra.mxu0 0.0
    %534 = vmatpush.msra.mxu0 0.0
    %535 = vmatpush.msra.mxu0 0.0
    %536 = vmatpush.msra.mxu0 0.0
    %537 = vmatpush.msra.mxu0 0.0
    %538 = vmatpush.msra.mxu0 0.0
    %539 = vmatpush.msra.mxu0 0.0
    %540 = vmatpush.msra.mxu0 0.0
    %541 = vmatpush.msra.mxu0 0.0
    %542 = vmatpush.msra.mxu0 %v525
    %543 = vmatmul.f32.gmra.mxu0 %v182
    %v544 = vpop.f32.mrf.mxu0
    %v545 = vadd.f32 0.0, %v544
    %546 = vmatmul.f32.gmra.mxu0 %v185
    %v547 = vpop.f32.mrf.mxu0
    %v548 = vadd.f32 0.0, %v547
    %549 = vdwg.mxu0
    %v551 = vperm.slane %v121, 0
    %553 = vmatpush.msra.mxu0 0.0
    %554 = vmatpush.msra.mxu0 0.0
    %555 = vmatpush.msra.mxu0 0.0
    %556 = vmatpush.msra.mxu0 0.0
    %557 = vmatpush.msra.mxu0 0.0
    %558 = vmatpush.msra.mxu0 0.0
    %559 = vmatpush.msra.mxu0 0.0
    %560 = vmatpush.msra.mxu0 0.0
    %561 = vmatpush.msra.mxu0 0.0
    %562 = vmatpush.msra.mxu0 0.0
    %563 = vmatpush.msra.mxu0 0.0
    %564 = vmatpush.msra.mxu0 0.0
    %565 = vmatpush.msra.mxu0 %v46
    %566 = vmatpush.msra.mxu0 %v45
    %567 = vmatpush.msra.mxu0 %v44
    %568 = vmatpush.msra.mxu0 %v43
    %569 = vmatmul.f32.gmra.mxu0 %v448
    %v570 = vpop.f32.mrf.mxu0
    %v571 = vadd.f32 %v551, %v570
    %572 = vmatmul.f32.gmra.mxu0 %v451
    %v573 = vpop.f32.mrf.mxu0
    %v574 = vadd.f32 %v551, %v573
    %575 = vdwg.mxu0
    %v577 = vperm.slane %v123, 0
    %579 = vmatpush.msra.mxu0 0.0
    %580 = vmatpush.msra.mxu0 0.0
    %581 = vmatpush.msra.mxu0 0.0
    %582 = vmatpush.msra.mxu0 0.0
    %583 = vmatpush.msra.mxu0 0.0
    %584 = vmatpush.msra.mxu0 0.0
    %585 = vmatpush.msra.mxu0 0.0
    %586 = vmatpush.msra.mxu0 0.0
    %587 = vmatpush.msra.mxu0 0.0
    %588 = vmatpush.msra.mxu0 0.0
    %589 = vmatpush.msra.mxu0 0.0
    %590 = vmatpush.msra.mxu0 0.0
    %591 = vmatpush.msra.mxu0 %v51
    %592 = vmatpush.msra.mxu0 %v50
    %593 = vmatpush.msra.mxu0 %v49
    %594 = vmatpush.msra.mxu0 %v48
    %595 = vmatmul.f32.gmra.mxu0 %v448
    %v596 = vpop.f32.mrf.mxu0
    %v597 = vadd.f32 %v577, %v596
    %598 = vmatmul.f32.gmra.mxu0 %v451
    %v599 = vpop.f32.mrf.mxu0
    %v600 = vadd.f32 %v577, %v599
    %601 = vdwg.mxu0
    %v603 = vperm.slane %v125, 0
    %605 = vmatpush.msra.mxu0 0.0
    %606 = vmatpush.msra.mxu0 0.0
    %607 = vmatpush.msra.mxu0 0.0
    %608 = vmatpush.msra.mxu0 0.0
    %609 = vmatpush.msra.mxu0 0.0
    %610 = vmatpush.msra.mxu0 0.0
    %611 = vmatpush.msra.mxu0 0.0
    %612 = vmatpush.msra.mxu0 0.0
    %613 = vmatpush.msra.mxu0 0.0
    %614 = vmatpush.msra.mxu0 0.0
    %615 = vmatpush.msra.mxu0 0.0
    %616 = vmatpush.msra.mxu0 0.0
    %617 = vmatpush.msra.mxu0 %v56
    %618 = vmatpush.msra.mxu0 %v55
    %619 = vmatpush.msra.mxu0 %v54
    %620 = vmatpush.msra.mxu0 %v53
    %621 = vmatmul.f32.gmra.mxu0 %v448
    %v622 = vpop.f32.mrf.mxu0
    %v623 = vadd.f32 %v603, %v622
    %624 = vmatmul.f32.gmra.mxu0 %v451
    %v625 = vpop.f32.mrf.mxu0
    %v626 = vadd.f32 %v603, %v625
    %627 = vdwg.mxu0
    %v629 = vperm.slane %v127, 0
    %631 = vmatpush.msra.mxu0 0.0
    %632 = vmatpush.msra.mxu0 0.0
    %633 = vmatpush.msra.mxu0 0.0
    %634 = vmatpush.msra.mxu0 0.0
    %635 = vmatpush.msra.mxu0 0.0
    %636 = vmatpush.msra.mxu0 0.0
    %637 = vmatpush.msra.mxu0 0.0
    %638 = vmatpush.msra.mxu0 0.0
    %639 = vmatpush.msra.mxu0 0.0
    %640 = vmatpush.msra.mxu0 0.0
    %641 = vmatpush.msra.mxu0 0.0
    %642 = vmatpush.msra.mxu0 0.0
    %643 = vmatpush.msra.mxu0 %v61
    %644 = vmatpush.msra.mxu0 %v60
    %645 = vmatpush.msra.mxu0 %v59
    %646 = vmatpush.msra.mxu0 %v58
    %647 = vmatmul.f32.gmra.mxu0 %v448
    %v648 = vpop.f32.mrf.mxu0
    %v649 = vadd.f32 %v629, %v648
    %650 = vmatmul.f32.gmra.mxu0 %v451
    %v651 = vpop.f32.mrf.mxu0
    %v652 = vadd.f32 %v629, %v651
    %653 = vdwg.mxu0
    %v655 = vperm.slane %v129, 0
    %657 = vmatpush.msra.mxu0 0.0
    %658 = vmatpush.msra.mxu0 0.0
    %659 = vmatpush.msra.mxu0 0.0
    %660 = vmatpush.msra.mxu0 0.0
    %661 = vmatpush.msra.mxu0 0.0
    %662 = vmatpush.msra.mxu0 0.0
    %663 = vmatpush.msra.mxu0 0.0
    %664 = vmatpush.msra.mxu0 0.0
    %665 = vmatpush.msra.mxu0 0.0
    %666 = vmatpush.msra.mxu0 0.0
    %667 = vmatpush.msra.mxu0 0.0
    %668 = vmatpush.msra.mxu0 0.0
    %669 = vmatpush.msra.mxu0 %v66
    %670 = vmatpush.msra.mxu0 %v65
    %671 = vmatpush.msra.mxu0 %v64
    %672 = vmatpush.msra.mxu0 %v63
    %673 = vmatmul.f32.gmra.mxu0 %v448
    %v674 = vpop.f32.mrf.mxu0
    %v675 = vadd.f32 %v655, %v674
    %676 = vmatmul.f32.gmra.mxu0 %v451
    %v677 = vpop.f32.mrf.mxu0
    %v678 = vadd.f32 %v655, %v677
    %679 = vdwg.mxu0
    %v681 = vperm.slane %v131, 0
    %683 = vmatpush.msra.mxu0 0.0
    %684 = vmatpush.msra.mxu0 0.0
    %685 = vmatpush.msra.mxu0 0.0
    %686 = vmatpush.msra.mxu0 0.0
    %687 = vmatpush.msra.mxu0 0.0
    %688 = vmatpush.msra.mxu0 0.0
    %689 = vmatpush.msra.mxu0 0.0
    %690 = vmatpush.msra.mxu0 0.0
    %691 = vmatpush.msra.mxu0 0.0
    %692 = vmatpush.msra.mxu0 0.0
    %693 = vmatpush.msra.mxu0 0.0
    %694 = vmatpush.msra.mxu0 0.0
    %695 = vmatpush.msra.mxu0 %v71
    %696 = vmatpush.msra.mxu0 %v70
    %697 = vmatpush.msra.mxu0 %v69
    %698 = vmatpush.msra.mxu0 %v68
    %699 = vmatmul.f32.gmra.mxu0 %v448
    %v700 = vpop.f32.mrf.mxu0
    %v701 = vadd.f32 %v681, %v700
    %702 = vmatmul.f32.gmra.mxu0 %v451
    %v703 = vpop.f32.mrf.mxu0
    %v704 = vadd.f32 %v681, %v703
    %705 = vdwg.mxu0
    %v707 = vperm.slane %v133, 0
    %709 = vmatpush.msra.mxu0 0.0
    %710 = vmatpush.msra.mxu0 0.0
    %711 = vmatpush.msra.mxu0 0.0
    %712 = vmatpush.msra.mxu0 0.0
    %713 = vmatpush.msra.mxu0 0.0
    %714 = vmatpush.msra.mxu0 0.0
    %715 = vmatpush.msra.mxu0 0.0
    %716 = vmatpush.msra.mxu0 0.0
    %717 = vmatpush.msra.mxu0 0.0
    %718 = vmatpush.msra.mxu0 0.0
    %719 = vmatpush.msra.mxu0 0.0
    %720 = vmatpush.msra.mxu0 0.0
    %721 = vmatpush.msra.mxu0 %v76
    %722 = vmatpush.msra.mxu0 %v75
    %723 = vmatpush.msra.mxu0 %v74
    %724 = vmatpush.msra.mxu0 %v73
    %725 = vmatmul.f32.gmra.mxu0 %v448
    %v726 = vpop.f32.mrf.mxu0
    %v727 = vadd.f32 %v707, %v726
    %728 = vmatmul.f32.gmra.mxu0 %v451
    %v729 = vpop.f32.mrf.mxu0
    %v730 = vadd.f32 %v707, %v729
    %731 = vdwg.mxu0
    %v733 = vperm.slane %v135, 0
    %735 = vmatpush.msra.mxu0 0.0
    %736 = vmatpush.msra.mxu0 0.0
    %737 = vmatpush.msra.mxu0 0.0
    %738 = vmatpush.msra.mxu0 0.0
    %739 = vmatpush.msra.mxu0 0.0
    %740 = vmatpush.msra.mxu0 0.0
    %741 = vmatpush.msra.mxu0 0.0
    %742 = vmatpush.msra.mxu0 0.0
    %743 = vmatpush.msra.mxu0 0.0
    %744 = vmatpush.msra.mxu0 0.0
    %745 = vmatpush.msra.mxu0 0.0
    %746 = vmatpush.msra.mxu0 0.0
    %747 = vmatpush.msra.mxu0 %v81
    %748 = vmatpush.msra.mxu0 %v80
    %749 = vmatpush.msra.mxu0 %v79
    %750 = vmatpush.msra.mxu0 %v78
    %751 = vmatmul.f32.gmra.mxu0 %v448
    %v752 = vpop.f32.mrf.mxu0
    %v753 = vadd.f32 %v733, %v752
    %754 = vmatmul.f32.gmra.mxu0 %v451
    %v755 = vpop.f32.mrf.mxu0
    %v756 = vadd.f32 %v733, %v755
    %757 = vdwg.mxu0
    %v759 = vperm.slane %v137, 0
    %761 = vmatpush.msra.mxu0 0.0
    %762 = vmatpush.msra.mxu0 0.0
    %763 = vmatpush.msra.mxu0 0.0
    %764 = vmatpush.msra.mxu0 0.0
    %765 = vmatpush.msra.mxu0 0.0
    %766 = vmatpush.msra.mxu0 0.0
    %767 = vmatpush.msra.mxu0 0.0
    %768 = vmatpush.msra.mxu0 0.0
    %769 = vmatpush.msra.mxu0 0.0
    %770 = vmatpush.msra.mxu0 0.0
    %771 = vmatpush.msra.mxu0 0.0
    %772 = vmatpush.msra.mxu0 0.0
    %773 = vmatpush.msra.mxu0 %v86
    %774 = vmatpush.msra.mxu0 %v85
    %775 = vmatpush.msra.mxu0 %v84
    %776 = vmatpush.msra.mxu0 %v83
    %777 = vmatmul.f32.gmra.mxu0 %v448
    %v778 = vpop.f32.mrf.mxu0
    %v779 = vadd.f32 %v759, %v778
    %780 = vmatmul.f32.gmra.mxu0 %v451
    %v781 = vpop.f32.mrf.mxu0
    %v782 = vadd.f32 %v759, %v781
    %783 = vdwg.mxu0
    %v785 = vsel %vm344, %v399, 0
    %v788 = vsel %vm344, %v400, 0
    %790 = vmatpush.msra.mxu0 0.0
    %791 = vmatpush.msra.mxu0 0.0
    %792 = vmatpush.msra.mxu0 0.0
    %793 = vmatpush.msra.mxu0 0.0
    %794 = vmatpush.msra.mxu0 0.0
    %795 = vmatpush.msra.mxu0 0.0
    %796 = vmatpush.msra.mxu0 0.0
    %797 = vmatpush.msra.mxu0 0.0
    %798 = vmatpush.msra.mxu0 0.0
    %799 = vmatpush.msra.mxu0 0.0
    %800 = vmatpush.msra.mxu0 0.0
    %801 = vmatpush.msra.mxu0 0.0
    %802 = vmatpush.msra.mxu0 0.0
    %803 = vmatpush.msra.mxu0 0.0
    %804 = vmatpush.msra.mxu0 %v652
    %805 = vmatpush.msra.mxu0 %v649
    %806 = vmatmul.f32.gmra.mxu0 %v785
    %v807 = vpop.f32.mrf.mxu0
    %v808 = vadd.f32 0.0, %v807
    %809 = vmatmul.f32.gmra.mxu0 %v788
    %v810 = vpop.f32.mrf.mxu0
    %v811 = vadd.f32 0.0, %v810
    %812 = vdwg.mxu0
    %v814 = vsel %vm344, %v374, 0
    %v817 = vsel %vm344, %v375, 0
    %819 = vmatpush.msra.mxu0 0.0
    %820 = vmatpush.msra.mxu0 0.0
    %821 = vmatpush.msra.mxu0 0.0
    %822 = vmatpush.msra.mxu0 0.0
    %823 = vmatpush.msra.mxu0 0.0
    %824 = vmatpush.msra.mxu0 0.0
    %825 = vmatpush.msra.mxu0 0.0
    %826 = vmatpush.msra.mxu0 0.0
    %827 = vmatpush.msra.mxu0 0.0
    %828 = vmatpush.msra.mxu0 0.0
    %829 = vmatpush.msra.mxu0 0.0
    %830 = vmatpush.msra.mxu0 0.0
    %831 = vmatpush.msra.mxu0 0.0
    %832 = vmatpush.msra.mxu0 0.0
    %833 = vmatpush.msra.mxu0 %v574
    %834 = vmatpush.msra.mxu0 %v571
    %835 = vmatmul.f32.gmra.mxu0 %v814
    %v836 = vpop.f32.mrf.mxu0
    %v837 = vadd.f32 %v808, %v836
    %838 = vmatmul.f32.gmra.mxu0 %v817
    %v839 = vpop.f32.mrf.mxu0
    %v840 = vadd.f32 %v811, %v839
    %841 = vdwg.mxu0
    %v843 = vperm.slane %v139, 0
    %v845 = vadd.f32 %v837, %v843
    %v846 = vadd.f32 %v840, %v843
    %847 = vmatpush.msra.mxu0 0.0
    %848 = vmatpush.msra.mxu0 0.0
    %849 = vmatpush.msra.mxu0 0.0
    %850 = vmatpush.msra.mxu0 0.0
    %851 = vmatpush.msra.mxu0 0.0
    %852 = vmatpush.msra.mxu0 0.0
    %853 = vmatpush.msra.mxu0 0.0
    %854 = vmatpush.msra.mxu0 0.0
    %855 = vmatpush.msra.mxu0 0.0
    %856 = vmatpush.msra.mxu0 0.0
    %857 = vmatpush.msra.mxu0 0.0
    %858 = vmatpush.msra.mxu0 0.0
    %859 = vmatpush.msra.mxu0 0.0
    %860 = vmatpush.msra.mxu0 0.0
    %861 = vmatpush.msra.mxu0 %v678
    %862 = vmatpush.msra.mxu0 %v675
    %863 = vmatmul.f32.gmra.mxu0 %v785
    %v864 = vpop.f32.mrf.mxu0
    %v865 = vadd.f32 0.0, %v864
    %866 = vmatmul.f32.gmra.mxu0 %v788
    %v867 = vpop.f32.mrf.mxu0
    %v868 = vadd.f32 0.0, %v867
    %869 = vdwg.mxu0
    %870 = vmatpush.msra.mxu0 0.0
    %871 = vmatpush.msra.mxu0 0.0
    %872 = vmatpush.msra.mxu0 0.0
    %873 = vmatpush.msra.mxu0 0.0
    %874 = vmatpush.msra.mxu0 0.0
    %875 = vmatpush.msra.mxu0 0.0
    %876 = vmatpush.msra.mxu0 0.0
    %877 = vmatpush.msra.mxu0 0.0
    %878 = vmatpush.msra.mxu0 0.0
    %879 = vmatpush.msra.mxu0 0.0
    %880 = vmatpush.msra.mxu0 0.0
    %881 = vmatpush.msra.mxu0 0.0
    %882 = vmatpush.msra.mxu0 0.0
    %883 = vmatpush.msra.mxu0 0.0
    %884 = vmatpush.msra.mxu0 %v600
    %885 = vmatpush.msra.mxu0 %v597
    %886 = vmatmul.f32.gmra.mxu0 %v814
    %v887 = vpop.f32.mrf.mxu0
    %v888 = vadd.f32 %v865, %v887
    %889 = vmatmul.f32.gmra.mxu0 %v817
    %v890 = vpop.f32.mrf.mxu0
    %v891 = vadd.f32 %v868, %v890
    %892 = vdwg.mxu0
    %v894 = vperm.slane %v141, 0
    %v896 = vadd.f32 %v888, %v894
    %v897 = vadd.f32 %v891, %v894
    %898 = vmatpush.msra.mxu0 0.0
    %899 = vmatpush.msra.mxu0 0.0
    %900 = vmatpush.msra.mxu0 0.0
    %901 = vmatpush.msra.mxu0 0.0
    %902 = vmatpush.msra.mxu0 0.0
    %903 = vmatpush.msra.mxu0 0.0
    %904 = vmatpush.msra.mxu0 0.0
    %905 = vmatpush.msra.mxu0 0.0
    %906 = vmatpush.msra.mxu0 0.0
    %907 = vmatpush.msra.mxu0 0.0
    %908 = vmatpush.msra.mxu0 0.0
    %909 = vmatpush.msra.mxu0 0.0
    %910 = vmatpush.msra.mxu0 0.0
    %911 = vmatpush.msra.mxu0 0.0
    %912 = vmatpush.msra.mxu0 %v704
    %913 = vmatpush.msra.mxu0 %v701
    %914 = vmatmul.f32.gmra.mxu0 %v785
    %v915 = vpop.f32.mrf.mxu0
    %v916 = vadd.f32 0.0, %v915
    %917 = vmatmul.f32.gmra.mxu0 %v788
    %v918 = vpop.f32.mrf.mxu0
    %v919 = vadd.f32 0.0, %v918
    %920 = vdwg.mxu0
    %921 = vmatpush.msra.mxu0 0.0
    %922 = vmatpush.msra.mxu0 0.0
    %923 = vmatpush.msra.mxu0 0.0
    %924 = vmatpush.msra.mxu0 0.0
    %925 = vmatpush.msra.mxu0 0.0
    %926 = vmatpush.msra.mxu0 0.0
    %927 = vmatpush.msra.mxu0 0.0
    %928 = vmatpush.msra.mxu0 0.0
    %929 = vmatpush.msra.mxu0 0.0
    %930 = vmatpush.msra.mxu0 0.0
    %931 = vmatpush.msra.mxu0 0.0
    %932 = vmatpush.msra.mxu0 0.0
    %933 = vmatpush.msra.mxu0 0.0
    %934 = vmatpush.msra.mxu0 0.0
    %935 = vmatpush.msra.mxu0 %v626
    %936 = vmatpush.msra.mxu0 %v623
    %937 = vmatmul.f32.gmra.mxu0 %v814
    %v938 = vpop.f32.mrf.mxu0
    %v939 = vadd.f32 %v916, %v938
    %940 = vmatmul.f32.gmra.mxu0 %v817
    %v941 = vpop.f32.mrf.mxu0
    %v942 = vadd.f32 %v919, %v941
    %943 = vdwg.mxu0
    %v945 = vperm.slane %v143, 0
    %v947 = vadd.f32 %v939, %v945
    %v948 = vadd.f32 %v942, %v945
    %v949 = vadd.f32 %v845, %v727
    %v950 = vadd.f32 %v846, %v730
    %v951 = vxor.u32 %v949, 2147483648
    %v952 = vxor.u32 %v950, 2147483648
    %v953 = vmul.f32 %v951, 1.442695
    %v954 = vpow.pop %v953
    %v955 = vmul.f32 %v952, 1.442695
    %v956 = vpow.pop %v955
    %v957 = vadd.f32 %v954, 1.0
    %v958 = vadd.f32 %v956, 1.0
    %v959 = vrcp.pop %v957
    %v960 = vmul.f32 %v957, %v959
    %v961 = vsub.f32 1.0, %v960
    %v962 = vmul.f32 %v959, %v961
    %v963 = vadd.f32 %v959, %v962
    %vm964 = vweird.f32 %v957
    %vm965 = vweird.f32 %v959
    %vm966 = vmor %vm964, %vm965
    %v967 = vsel %vm966, %v959, %v963
    %v968 = vand.u32 2147483647, %v957
    %vm969 = vcmp.eq.f32.partialorder %v968, 8.507059e+37
    %v970 = vand.u32 %v957, 2147483648
    %v971 = vor.u32 1.1754944e-38, %v970
    %v972 = vsel %vm969, %v971, %v967
    %v973 = vmul.f32 1.0, %v972
    %v974 = vrcp.pop %v958
    %v975 = vmul.f32 %v958, %v974
    %v976 = vsub.f32 1.0, %v975
    %v977 = vmul.f32 %v974, %v976
    %v978 = vadd.f32 %v974, %v977
    %vm979 = vweird.f32 %v958
    %vm980 = vweird.f32 %v974
    %vm981 = vmor %vm979, %vm980
    %v982 = vsel %vm981, %v974, %v978
    %v983 = vand.u32 2147483647, %v958
    %vm984 = vcmp.eq.f32.partialorder %v983, 8.507059e+37
    %v985 = vand.u32 %v958, 2147483648
    %v986 = vor.u32 1.1754944e-38, %v985
    %v987 = vsel %vm984, %v986, %v982
    %v988 = vmul.f32 1.0, %v987
    %v989 = vadd.f32 %v896, %v753
    %v990 = vadd.f32 %v897, %v756
    %v991 = vxor.u32 %v989, 2147483648
    %v992 = vxor.u32 %v990, 2147483648
    %v993 = vmul.f32 %v991, 1.442695
    %v994 = vpow.pop %v993
    %v995 = vmul.f32 %v992, 1.442695
    %v996 = vpow.pop %v995
    %v997 = vadd.f32 %v994, 1.0
    %v998 = vadd.f32 %v996, 1.0
    %v999 = vrcp.pop %v997
    %v1000 = vmul.f32 %v997, %v999
    %v1001 = vsub.f32 1.0, %v1000
    %v1002 = vmul.f32 %v999, %v1001
    %v1003 = vadd.f32 %v999, %v1002
    %vm1004 = vweird.f32 %v997
    %vm1005 = vweird.f32 %v999
    %vm1006 = vmor %vm1004, %vm1005
    %v1007 = vsel %vm1006, %v999, %v1003
    %v1008 = vand.u32 2147483647, %v997
    %vm1009 = vcmp.eq.f32.partialorder %v1008, 8.507059e+37
    %v1010 = vand.u32 %v997, 2147483648
    %v1011 = vor.u32 1.1754944e-38, %v1010
    %v1012 = vsel %vm1009, %v1011, %v1007
    %v1013 = vmul.f32 1.0, %v1012
    %v1014 = vrcp.pop %v998
    %v1015 = vmul.f32 %v998, %v1014
    %v1016 = vsub.f32 1.0, %v1015
    %v1017 = vmul.f32 %v1014, %v1016
    %v1018 = vadd.f32 %v1014, %v1017
    %vm1019 = vweird.f32 %v998
    %vm1020 = vweird.f32 %v1014
    %vm1021 = vmor %vm1019, %vm1020
    %v1022 = vsel %vm1021, %v1014, %v1018
    %v1023 = vand.u32 2147483647, %v998
    %vm1024 = vcmp.eq.f32.partialorder %v1023, 8.507059e+37
    %v1025 = vand.u32 %v998, 2147483648
    %v1026 = vor.u32 1.1754944e-38, %v1025
    %v1027 = vsel %vm1024, %v1026, %v1022
    %v1028 = vmul.f32 1.0, %v1027
    %v1029 = vmul.f32 %v973, %v779
    %v1030 = vmul.f32 %v988, %v782
    %v1031 = vadd.f32 %v947, %v1029
    %v1032 = vadd.f32 %v948, %v1030
    %v1033 = vtanh.pop %v1031
    %v1034 = vtanh.pop %v1032
    %v1035 = vsub.f32 %v326, %v1033
    %v1036 = vsub.f32 %v327, %v1034
    %v1037 = vmul.f32 %v1013, %v1035
    %v1038 = vmul.f32 %v1028, %v1036
    %v1039 = vadd.f32 %v1033, %v1037
    %v1040 = vadd.f32 %v1034, %v1038
    %v1042 = vperm.slane %v145, 0
    %v1045 = vsel %vm266, %v1039, 0
    %v1048 = vsel %vm266, %v1040, 0
    %1050 = vmatpush.msra.mxu0 0.0
    %1051 = vmatpush.msra.mxu0 0.0
    %1052 = vmatpush.msra.mxu0 0.0
    %1053 = vmatpush.msra.mxu0 0.0
    %1054 = vmatpush.msra.mxu0 0.0
    %1055 = vmatpush.msra.mxu0 0.0
    %1056 = vmatpush.msra.mxu0 0.0
    %1057 = vmatpush.msra.mxu0 0.0
    %1058 = vmatpush.msra.mxu0 0.0
    %1059 = vmatpush.msra.mxu0 0.0
    %1060 = vmatpush.msra.mxu0 0.0
    %1061 = vmatpush.msra.mxu0 0.0
    %1062 = vmatpush.msra.mxu0 %v91
    %1063 = vmatpush.msra.mxu0 %v90
    %1064 = vmatpush.msra.mxu0 %v89
    %1065 = vmatpush.msra.mxu0 %v88
    %1066 = vmatmul.f32.gmra.mxu0 %v1045
    %v1067 = vpop.f32.mrf.mxu0
    %v1068 = vadd.f32 %v1042, %v1067
    %1069 = vmatmul.f32.gmra.mxu0 %v1048
    %v1070 = vpop.f32.mrf.mxu0
    %v1071 = vadd.f32 %v1042, %v1070
    %1072 = vdwg.mxu0
    %v1074 = vsel %vm266, %v1068, 0
    %v1077 = vsel %vm266, %v1071, 0
    %v1080 = vsel %vm266, %v500, 0
    %1082 = vmatpush.xpose.msra.mxu0 0.0
    %1083 = vmatpush.xpose.msra.mxu0 0.0
    %1084 = vmatpush.xpose.msra.mxu0 0.0
    %1085 = vmatpush.xpose.msra.mxu0 0.0
    %1086 = vmatpush.xpose.msra.mxu0 0.0
    %1087 = vmatpush.xpose.msra.mxu0 0.0
    %1088 = vmatpush.xpose.msra.mxu0 0.0
    %1089 = vmatpush.xpose.msra.mxu0 0.0
    %1090 = vmatpush.xpose.msra.mxu0 0.0
    %1091 = vmatpush.xpose.msra.mxu0 0.0
    %1092 = vmatpush.xpose.msra.mxu0 0.0
    %1093 = vmatpush.xpose.msra.mxu0 0.0
    %1094 = vmatpush.xpose.msra.mxu0 0.0
    %1095 = vmatpush.xpose.msra.mxu0 0.0
    %1096 = vmatpush.xpose.msra.mxu0 0.0
    %1097 = vmatpush.xpose.msra.mxu0 %v1080
    %1098 = vmatmul.f32.gmra.mxu0 %v1074
    %v1099 = vpop.f32.mrf.mxu0
    %v1100 = vadd.f32 0.0, %v1099
    %1101 = vmatmul.f32.gmra.mxu0 %v1077
    %v1102 = vpop.f32.mrf.mxu0
    %v1103 = vadd.f32 0.0, %v1102
    %1104 = vdwg.mxu0
    %v1105 = vmul.f32 %v1100, 0.17677669
    %v1106 = vmul.f32 %v1103, 0.17677669
    %v1107 = vsel %vm166, %v1105, -1e+30
    %v1108 = vsel %vm167, %v1106, -1e+30
    %v1109 = vsel %vm180, %v1107, -inf
    %v1110 = vsel %vm180, %v1108, -inf
    %v1111 = vmax.f32 %v1109, %v1110
    %v1112 = vrot.slane %v1111, 4
    %v1113 = vmax.f32 %v1111, %v1112
    %v1114 = vrot.slane %v1113, 2
    %v1115 = vmax.f32 %v1113, %v1114
    %v1116 = vrot.slane %v1115, 1
    %v1117 = vmax.f32 %v1115, %v1116
    %v1118 = vsub.f32 %v1107, %v1117
    %v1119 = vsub.f32 %v1108, %v1117
    %v1120 = vmul.f32 %v1118, 1.442695
    %v1121 = vpow.pop %v1120
    %v1122 = vmul.f32 %v1119, 1.442695
    %v1123 = vpow.pop %v1122
    %v1124 = vsel %vm180, %v1121, 0.0
    %v1125 = vsel %vm180, %v1123, 0.0
    %v1126 = vadd.f32 %v1124, %v1125
    %v1127 = vrot.slane %v1126, 4
    %v1128 = vadd.f32 %v1126, %v1127
    %v1129 = vrot.slane %v1128, 2
    %v1130 = vadd.f32 %v1128, %v1129
    %v1131 = vrot.slane %v1130, 1
    %v1132 = vadd.f32 %v1130, %v1131
    %v1133 = vrcp.pop %v1132
    %v1134 = vmul.f32 %v1132, %v1133
    %v1135 = vsub.f32 1.0, %v1134
    %v1136 = vmul.f32 %v1133, %v1135
    %v1137 = vadd.f32 %v1133, %v1136
    %vm1138 = vweird.f32 %v1132
    %vm1139 = vweird.f32 %v1133
    %vm1140 = vmor %vm1138, %vm1139
    %v1141 = vsel %vm1140, %v1133, %v1137
    %v1142 = vand.u32 2147483647, %v1132
    %vm1143 = vcmp.eq.f32.partialorder %v1142, 8.507059e+37
    %v1144 = vand.u32 %v1132, 2147483648
    %v1145 = vor.u32 1.1754944e-38, %v1144
    %v1146 = vsel %vm1143, %v1145, %v1141
    %v1147 = vmul.f32 %v1121, %v1146
    %v1148 = vmul.f32 %v1123, %v1146
    %v1149 = vsel %vm180, %v1147, 0.0
    %1150 = vadd.xlane.f32.xlu0 %v1149
    %v1151 = vpop.xlane.xlu0 %1150
    %v1152 = vsel %vm180, %v1148, 0.0
    %1153 = vadd.xlane.f32.xlu0 %v1152
    %v1154 = vpop.xlane.xlu0 %1153
    %v1155 = vsub.f32 1.0, %v1151
    %v1156 = vsub.f32 1.0, %v1154
    %v1157 = vmul.f32 %v1155, %v1039
    %v1158 = vmul.f32 %v1156, %v1040
    %v1159 = vmul.f32 %v1151, %v545
    %v1160 = vmul.f32 %v1154, %v548
    %v1161 = vadd.f32 %v1157, %v1159
    %v1162 = vadd.f32 %v1158, %v1160
    %v1164 = vperm.slane %v149, 0
    %v1167 = vsel %vm266, %v1161, 0
    %v1170 = vsel %vm266, %v1162, 0
    %1172 = vmatpush.msra.mxu0 0.0
    %1173 = vmatpush.msra.mxu0 0.0
    %1174 = vmatpush.msra.mxu0 0.0
    %1175 = vmatpush.msra.mxu0 0.0
    %1176 = vmatpush.msra.mxu0 0.0
    %1177 = vmatpush.msra.mxu0 0.0
    %1178 = vmatpush.msra.mxu0 0.0
    %1179 = vmatpush.msra.mxu0 0.0
    %1180 = vmatpush.msra.mxu0 0.0
    %1181 = vmatpush.msra.mxu0 0.0
    %1182 = vmatpush.msra.mxu0 0.0
    %1183 = vmatpush.msra.mxu0 0.0
    %1184 = vmatpush.msra.mxu0 %v101
    %1185 = vmatpush.msra.mxu0 %v100
    %1186 = vmatpush.msra.mxu0 %v99
    %1187 = vmatpush.msra.mxu0 %v98
    %1188 = vmatmul.f32.gmra.mxu0 %v1167
    %v1189 = vpop.f32.mrf.mxu0
    %v1190 = vadd.f32 %v1164, %v1189
    %1191 = vmatmul.f32.gmra.mxu0 %v1170
    %v1192 = vpop.f32.mrf.mxu0
    %v1193 = vadd.f32 %v1164, %v1192
    %1194 = vdwg.mxu0
    %v1196 = vsel %vm266, %v1190, 0
    %v1199 = vsel %vm266, %v1193, 0
    %v1202 = vsel %vm266, %v523, 0
    %1204 = vmatpush.xpose.msra.mxu0 0.0
    %1205 = vmatpush.xpose.msra.mxu0 0.0
    %1206 = vmatpush.xpose.msra.mxu0 0.0
    %1207 = vmatpush.xpose.msra.mxu0 0.0
    %1208 = vmatpush.xpose.msra.mxu0 0.0
    %1209 = vmatpush.xpose.msra.mxu0 0.0
    %1210 = vmatpush.xpose.msra.mxu0 0.0
    %1211 = vmatpush.xpose.msra.mxu0 0.0
    %1212 = vmatpush.xpose.msra.mxu0 0.0
    %1213 = vmatpush.xpose.msra.mxu0 0.0
    %1214 = vmatpush.xpose.msra.mxu0 0.0
    %1215 = vmatpush.xpose.msra.mxu0 0.0
    %1216 = vmatpush.xpose.msra.mxu0 0.0
    %1217 = vmatpush.xpose.msra.mxu0 0.0
    %1218 = vmatpush.xpose.msra.mxu0 0.0
    %1219 = vmatpush.xpose.msra.mxu0 %v1202
    %1220 = vmatmul.f32.gmra.mxu0 %v1196
    %v1221 = vpop.f32.mrf.mxu0
    %v1222 = vadd.f32 0.0, %v1221
    %1223 = vmatmul.f32.gmra.mxu0 %v1199
    %v1224 = vpop.f32.mrf.mxu0
    %v1225 = vadd.f32 0.0, %v1224
    %1226 = vdwg.mxu0
    %v1227 = vmul.f32 %v1222, 0.17677669
    %v1228 = vmul.f32 %v1225, 0.17677669
    %v1229 = vsel %vm166, %v1227, -1e+30
    %v1230 = vsel %vm167, %v1228, -1e+30
    %v1231 = vsel %vm180, %v1229, -inf
    %v1232 = vsel %vm180, %v1230, -inf
    %v1233 = vmax.f32 %v1231, %v1232
    %v1234 = vrot.slane %v1233, 4
    %v1235 = vmax.f32 %v1233, %v1234
    %v1236 = vrot.slane %v1235, 2
    %v1237 = vmax.f32 %v1235, %v1236
    %v1238 = vrot.slane %v1237, 1
    %v1239 = vmax.f32 %v1237, %v1238
    %v1240 = vsub.f32 %v1229, %v1239
    %v1241 = vsub.f32 %v1230, %v1239
    %v1242 = vmul.f32 %v1240, 1.442695
    %v1243 = vpow.pop %v1242
    %v1244 = vmul.f32 %v1241, 1.442695
    %v1245 = vpow.pop %v1244
    %v1246 = vsel %vm180, %v1243, 0.0
    %v1247 = vsel %vm180, %v1245, 0.0
    %v1248 = vadd.f32 %v1246, %v1247
    %v1249 = vrot.slane %v1248, 4
    %v1250 = vadd.f32 %v1248, %v1249
    %v1251 = vrot.slane %v1250, 2
    %v1252 = vadd.f32 %v1250, %v1251
    %v1253 = vrot.slane %v1252, 1
    %v1254 = vadd.f32 %v1252, %v1253
    %v1255 = vrcp.pop %v1254
    %v1256 = vmul.f32 %v1254, %v1255
    %v1257 = vsub.f32 1.0, %v1256
    %v1258 = vmul.f32 %v1255, %v1257
    %v1259 = vadd.f32 %v1255, %v1258
    %vm1260 = vweird.f32 %v1254
    %vm1261 = vweird.f32 %v1255
    %vm1262 = vmor %vm1260, %vm1261
    %v1263 = vsel %vm1262, %v1255, %v1259
    %v1264 = vand.u32 2147483647, %v1254
    %vm1265 = vcmp.eq.f32.partialorder %v1264, 8.507059e+37
    %v1266 = vand.u32 %v1254, 2147483648
    %v1267 = vor.u32 1.1754944e-38, %v1266
    %v1268 = vsel %vm1265, %v1267, %v1263
    %v1269 = vmul.f32 %v1243, %v1268
    %v1270 = vmul.f32 %v1245, %v1268
    %v1271 = vsel %vm180, %v1269, 0.0
    %1272 = vadd.xlane.f32.xlu0 %v1271
    %v1273 = vpop.xlane.xlu0 %1272
    %v1274 = vsel %vm180, %v1270, 0.0
    %1275 = vadd.xlane.f32.xlu0 %v1274
    %v1276 = vpop.xlane.xlu0 %1275
    %v1277 = vmul.f32 %v1273, %v1161
    %v1278 = vmul.f32 %v1276, %v1162
    %1279 = vmatpush.msra.mxu0 0.0
    %1280 = vmatpush.msra.mxu0 0.0
    %1281 = vmatpush.msra.mxu0 0.0
    %1282 = vmatpush.msra.mxu0 0.0
    %1283 = vmatpush.msra.mxu0 0.0
    %1284 = vmatpush.msra.mxu0 0.0
    %1285 = vmatpush.msra.mxu0 0.0
    %1286 = vmatpush.msra.mxu0 0.0
    %1287 = vmatpush.msra.mxu0 0.0
    %1288 = vmatpush.msra.mxu0 0.0
    %1289 = vmatpush.msra.mxu0 0.0
    %1290 = vmatpush.msra.mxu0 0.0
    %1291 = vmatpush.msra.mxu0 0.0
    %1292 = vmatpush.msra.mxu0 0.0
    %1293 = vmatpush.msra.mxu0 %v1278
    %1294 = vmatpush.msra.mxu0 %v1277
    %1295 = vmatmul.f32.gmra.mxu0 %v406
    %v1296 = vpop.f32.mrf.mxu0
    %v1297 = vadd.f32 0.0, %v1296
    %1298 = vdwg.mxu0
    %1299 = vmatpush.msra.mxu0 0.0
    %1300 = vmatpush.msra.mxu0 0.0
    %1301 = vmatpush.msra.mxu0 0.0
    %1302 = vmatpush.msra.mxu0 0.0
    %1303 = vmatpush.msra.mxu0 0.0
    %1304 = vmatpush.msra.mxu0 0.0
    %1305 = vmatpush.msra.mxu0 0.0
    %1306 = vmatpush.msra.mxu0 0.0
    %1307 = vmatpush.msra.mxu0 0.0
    %1308 = vmatpush.msra.mxu0 0.0
    %1309 = vmatpush.msra.mxu0 0.0
    %1310 = vmatpush.msra.mxu0 0.0
    %1311 = vmatpush.msra.mxu0 %v116
    %1312 = vmatpush.msra.mxu0 %v115
    %1313 = vmatpush.msra.mxu0 %v114
    %1314 = vmatpush.msra.mxu0 %v113
    %1315 = vmatmul.f32.gmra.mxu0 %v1167
    %v1316 = vpop.f32.mrf.mxu0
    %v1317 = vadd.f32 0.0, %v1316
    %1318 = vmatmul.f32.gmra.mxu0 %v1170
    %v1319 = vpop.f32.mrf.mxu0
    %v1320 = vadd.f32 0.0, %v1319
    %1321 = vdwg.mxu0
    %v1322 = vadd.f32 %v471, %v1317
    %v1323 = vadd.f32 %v474, %v1320
    %v1324 = vxor.u32 %v1322, 2147483648
    %v1325 = vxor.u32 %v1323, 2147483648
    %v1326 = vmul.f32 %v1324, 1.442695
    %v1327 = vpow.pop %v1326
    %v1328 = vmul.f32 %v1325, 1.442695
    %v1329 = vpow.pop %v1328
    %v1330 = vadd.f32 %v1327, 1.0
    %v1331 = vadd.f32 %v1329, 1.0
    %v1332 = vrcp.pop %v1330
    %v1333 = vmul.f32 %v1330, %v1332
    %v1334 = vsub.f32 1.0, %v1333
    %v1335 = vmul.f32 %v1332, %v1334
    %v1336 = vadd.f32 %v1332, %v1335
    %vm1337 = vweird.f32 %v1330
    %vm1338 = vweird.f32 %v1332
    %vm1339 = vmor %vm1337, %vm1338
    %v1340 = vsel %vm1339, %v1332, %v1336
    %v1341 = vand.u32 2147483647, %v1330
    %vm1342 = vcmp.eq.f32.partialorder %v1341, 8.507059e+37
    %v1343 = vand.u32 %v1330, 2147483648
    %v1344 = vor.u32 1.1754944e-38, %v1343
    %v1345 = vsel %vm1342, %v1344, %v1340
    %v1346 = vmul.f32 1.0, %v1345
    %v1347 = vrcp.pop %v1331
    %v1348 = vmul.f32 %v1331, %v1347
    %v1349 = vsub.f32 1.0, %v1348
    %v1350 = vmul.f32 %v1347, %v1349
    %v1351 = vadd.f32 %v1347, %v1350
    %vm1352 = vweird.f32 %v1331
    %vm1353 = vweird.f32 %v1347
    %vm1354 = vmor %vm1352, %vm1353
    %v1355 = vsel %vm1354, %v1347, %v1351
    %v1356 = vand.u32 2147483647, %v1331
    %vm1357 = vcmp.eq.f32.partialorder %v1356, 8.507059e+37
    %v1358 = vand.u32 %v1331, 2147483648
    %v1359 = vor.u32 1.1754944e-38, %v1358
    %v1360 = vsel %vm1357, %v1359, %v1355
    %v1361 = vmul.f32 1.0, %v1360
    %v1362 = vmul.f32 %v1346, %v326
    %v1363 = vmul.f32 %v1361, %v327
    %v1364 = vsub.f32 1.0, %v1346
    %v1365 = vsub.f32 1.0, %v1361
    %v1366 = vmul.f32 %v1364, %v1161
    %v1367 = vmul.f32 %v1365, %v1162
    %v1368 = vadd.f32 %v1362, %v1366
    %v1369 = vadd.f32 %v1363, %v1367
    %1370 = vst.msk [vmem:[#allocation5] sm:$0xff] %vm266, %v1368
    %1371 = vst.msk [vmem:[#allocation5 + $0x8] sm:$0xff] %vm266, %v1369
    %vm1372 = vcmask 254976
    %1373 = vst.msk [vmem:[#allocation6] sm:$0x3] %vm1372, %v1297
    // Predicated region
    $region30: #{star_session_graph_forward.1} parent=1 // pred_check
      _
    $region31: #{star_session_graph_forward.1} parent=1 // pred_check_branch
      %1375 = sbr.rel (0) target = $region33
    $region32: #{star_session_graph_forward.1} parent=1 // pred_region
      %1377 = vsyncadd [#allocation4], 0
      %s1378 = sshll.u32 [#allocation5], 4
      %s1379 = int_to_ptr.vmem [resolvable:$true] %s1378
      %s1380 = sshll.u32 %s6, 4
      %s1381 = int_to_ptr.hbm [resolvable:$true] %s1380
      %1386 = dma.vmem_to_hbm [thread:$0]  %s1379, 256, %s1381, [#allocation4], 128, 128, 8
    $region33: #{star_session_graph_forward.1} parent=1 // pred_fallthru
      _
    // Predicated region
    $region34: #{star_session_graph_forward.1} parent=1 // pred_check
      _
    $region35: #{star_session_graph_forward.1} parent=1 // pred_check_branch
      %1388 = sbr.rel (0) target = $region37
    $region36: #{star_session_graph_forward.1} parent=1 // pred_region
      %1390 = vsyncadd [#allocation7], 0
      %s1392 = sshll.u32 [#allocation6], 4
      %s1393 = int_to_ptr.vmem [resolvable:$true] %s1392
      %s1394 = sshll.u32 %s7, 4
      %s1395 = int_to_ptr.hbm [resolvable:$true] %s1394
      %1397 = dma.vmem_to_hbm [thread:$0]  %s1393, 32, %s1395, [#allocation7]
    $region37: #{star_session_graph_forward.1} parent=1 // pred_fallthru
      _
    // Predicated region
    $region38: #{star_session_graph_forward.1} parent=1 // pred_check
      _
    $region39: #{star_session_graph_forward.1} parent=1 // pred_check_branch
      %1399 = sbr.rel (0) target = $region41
    $region40: #{star_session_graph_forward.1} parent=1 // pred_region
      %1401 = dma.done [#allocation4], 256
    $region41: #{star_session_graph_forward.1} parent=1 // pred_fallthru
      _
    // Predicated region
    $region42: #{star_session_graph_forward.1} parent=1 // pred_check
      _
    $region43: #{star_session_graph_forward.1} parent=1 // pred_check_branch
      %1403 = sbr.rel (0) target = $region45
    $region44: #{star_session_graph_forward.1} parent=1 // pred_region
      %1405 = dma.done [#allocation7], 32
    $region45: #{star_session_graph_forward.1} parent=1 // pred_fallthru
      _
    %1406 = vsyncpa [#allocation3], 1
    %1407 = vsyncpa [#allocation4], 1
    %1408 = vsyncpa [#allocation7], 1

</llo_original>
